<compile_context>
chip_gen: v7x
topology: tpu7x:2x2x1
jax: 0.10.0
libtpu: 0.0.40
codegen_flags: <defaults>
</compile_context>

<pallas_src>
import functools

import numpy as np
import jax
import jax.numpy as jnp
from jax import lax
from jax.experimental import pallas as pl
from jax.experimental.pallas import tpu as pltpu


def base_attention_kernel(q_ref, k_ref, v_ref,
                          wq_ref, wk_ref, wv_ref,
                          bq_ref, bk_ref, bv_ref,
                          wo_ref, bo_ref,
                          out_ref,
                          qh_sc, m_sc, l_sc, acc_sc,
                          *, n_heads, d_head, inv_scale):
    """Grid = (batch, q_tile, kv_tile); kv_tile is the (innermost) reduction axis.

    q_ref/k_ref/v_ref blocks: (1, tq, d_model) / (1, tk, d_model).
    Scratch (persistent across the kv axis, reset at kv == 0):
      qh_sc : (tq, H*dh)  scaled, bias-added Q projection (computed once per q-tile)
      m_sc  : (tq, H)     running row max per head
      l_sc  : (tq, H)     running softmax denominator per head
      acc_sc: (tq, H*dh)  running un-normalized sum_k softmax(s) @ V per head
    """
    kv_idx = pl.program_id(2)
    n_kv = pl.num_programs(2)

    @pl.when(kv_idx == 0)
    def _init():
        # Fused Q projection for all heads (one MXU matmul), bias fused, and the
        # 1/sqrt(d_head) scale folded in here instead of into every score tile.
        xq = q_ref[0]                                                  # [tq, D]
        qh_sc[...] = (jnp.dot(xq, wq_ref[...],
                              preferred_element_type=jnp.float32)
                      + bq_ref[...]) * inv_scale                       # [tq, H*dh]
        m_sc[...] = jnp.full(m_sc.shape, -jnp.inf, m_sc.dtype)
        l_sc[...] = jnp.zeros(l_sc.shape, l_sc.dtype)
        acc_sc[...] = jnp.zeros(acc_sc.shape, acc_sc.dtype)

    # Fused K/V projections for this key/value block (one MXU matmul each).
    # NOTE: re-projected once per (q-tile, kv-tile) pair; cheap relative to the
    # attention matmuls for tq >= d_model/2, and it keeps everything in one kernel.
    xk = k_ref[0]
    xv = v_ref[0]
    kh = jnp.dot(xk, wk_ref[...], preferred_element_type=jnp.float32) + bk_ref[...]  # [tk, H*dh]
    vh = jnp.dot(xv, wv_ref[...], preferred_element_type=jnp.float32) + bv_ref[...]  # [tk, H*dh]

    qh = qh_sc[...]                                                    # [tq, H*dh]

    # Online-softmax update.  The QK^T / PV contractions are inherently per-head
    # (block-diagonal over d_head); the head loop is statically unrolled (small H)
    # and operates on static lane slices of the fused 2-D tiles (no 3-D relayout).
    for h in range(n_heads):
        lo, hi = h * d_head, (h + 1) * d_head
        q_h = qh[:, lo:hi]                                             # [tq, dh]
        k_h = kh[:, lo:hi]                                             # [tk, dh]
        v_h = vh[:, lo:hi]                                             # [tk, dh]

        # s = q_h @ k_h^T with the transpose folded into the contraction.
        s = lax.dot_general(q_h, k_h, (((1,), (1,)), ((), ())),
                            preferred_element_type=jnp.float32)        # [tq, tk]

        m_prev = m_sc[:, h:h + 1]                                      # [tq, 1]
        m_new = jnp.maximum(m_prev, jnp.max(s, axis=-1, keepdims=True))
        alpha = jnp.exp(m_prev - m_new)                                # [tq, 1]
        p = jnp.exp(s - m_new)                                         # [tq, tk]

        l_sc[:, h:h + 1] = alpha * l_sc[:, h:h + 1] + jnp.sum(p, axis=-1, keepdims=True)
        acc_sc[:, lo:hi] = alpha * acc_sc[:, lo:hi] + jnp.dot(
            p, v_h, preferred_element_type=jnp.float32)
        m_sc[:, h:h + 1] = m_new

    @pl.when(kv_idx == n_kv - 1)
    def _finalize():
        # Normalize per head, reproducing torch.where(isnan(pattern), 0, pattern):
        # any NaN / fully-degenerate score row makes the reference's softmax row
        # NaN and then zeroed, i.e. that head contributes nothing for that query.
        for h in range(n_heads):
            lo, hi = h * d_head, (h + 1) * d_head
            l_h = l_sc[:, h:h + 1]                                     # [tq, 1]
            bad_row = jnp.isnan(l_h)
            inv_l = pl.reciprocal(l_h, approx=False)   # approx=True -> EUP, looser parity
            acc_sc[:, lo:hi] = jnp.where(bad_row, 0.0, acc_sc[:, lo:hi] * inv_l)

        # Fused output projection across all heads (one MXU matmul) + bias.
        z = acc_sc[...]                                                # [tq, H*dh]
        out_ref[0] = (jnp.dot(z, wo_ref[...], preferred_element_type=jnp.float32)
                      + bo_ref[...]).astype(out_ref.dtype)


def _pick_tile(n, cap):
    """Largest multiple-of-8 tile <= cap that divides n; else the whole axis."""
    if n <= cap:
        return n
    t = cap - (cap % 8)
    while t >= 8:
        if n % t == 0:
            return t
        t -= 8
    return n


def base_attention(query, key, value, params, *, q_block=128, kv_block=128):
    """query/key/value: [B, S, d_model] float32 (bf16 inputs also OK: f32 accum)."""
    B, Sq, d_model = query.shape
    Sk = key.shape[1]
    n_heads, _, d_head = params["W_Q"].shape
    hd = n_heads * d_head
    inv_scale = 1.0 / float(np.sqrt(d_head))

    tq = _pick_tile(Sq, q_block)
    tk = _pick_tile(Sk, kv_block)
    nq = Sq // tq
    nk = Sk // tk

    # Host-side head fusion (exactly mirrors the torch module's rearranges):
    #   wq_f[m, h*dh + d] = W_Q[h, m, d];  bq_f[h*dh + d] = b_Q[h, d]
    #   wo_f[h*dh + d, m] = W_O[h, d, m]
    f32 = jnp.float32
    wq = jnp.transpose(params["W_Q"], (1, 0, 2)).reshape(d_model, hd).astype(f32)
    wk = jnp.transpose(params["W_K"], (1, 0, 2)).reshape(d_model, hd).astype(f32)
    wv = jnp.transpose(params["W_V"], (1, 0, 2)).reshape(d_model, hd).astype(f32)
    bq = params["b_Q"].reshape(1, hd).astype(f32)
    bk = params["b_K"].reshape(1, hd).astype(f32)
    bv = params["b_V"].reshape(1, hd).astype(f32)
    wo = params["W_O"].reshape(hd, d_model).astype(f32)
    bo = params["b_O"].reshape(1, d_model).astype(f32)

    kernel = functools.partial(base_attention_kernel,
                               n_heads=n_heads, d_head=d_head, inv_scale=inv_scale)

    # Advisory cost estimate for XLA scheduling around the custom call.
    flops = 2 * B * (Sq * d_model * hd          # Q projection
                     + 2 * Sk * d_model * hd    # K, V projections
                     + 2 * Sq * Sk * hd         # QK^T + PV (all heads)
                     + Sq * hd * d_model)       # output projection
    bytes_accessed = 4 * (query.size + key.size + value.size + B * Sq * d_model
                          + 3 * d_model * hd + hd * d_model + 3 * hd + d_model)
    cost = pl.CostEstimate(flops=int(flops),
                           transcendentals=int(B * n_heads * Sq * Sk),
                           bytes_accessed=int(bytes_accessed))

    def full_spec(shape):
        return pl.BlockSpec(shape, lambda b, i, k, _s=shape: (0,) * len(_s))

    return pl.pallas_call(
        kernel,
        out_shape=jax.ShapeDtypeStruct((B, Sq, d_model), query.dtype),
        grid=(B, nq, nk),
        in_specs=[
            pl.BlockSpec((1, tq, d_model), lambda b, i, k: (b, i, 0)),   # query
            pl.BlockSpec((1, tk, d_model), lambda b, i, k: (b, k, 0)),   # key
            pl.BlockSpec((1, tk, d_model), lambda b, i, k: (b, k, 0)),   # value
            full_spec((d_model, hd)),                                    # W_Q fused
            full_spec((d_model, hd)),                                    # W_K fused
            full_spec((d_model, hd)),                                    # W_V fused
            full_spec((1, hd)),                                          # b_Q fused
            full_spec((1, hd)),                                          # b_K fused
            full_spec((1, hd)),                                          # b_V fused
            full_spec((hd, d_model)),                                    # W_O fused
            full_spec((1, d_model)),                                     # b_O
        ],
        out_specs=pl.BlockSpec((1, tq, d_model), lambda b, i, k: (b, i, 0)),
        scratch_shapes=[
            pltpu.VMEM((tq, hd), jnp.float32),        # scaled Q projection
            pltpu.VMEM((tq, n_heads), jnp.float32),   # running max (per head)
            pltpu.VMEM((tq, n_heads), jnp.float32),   # running denominator (per head)
            pltpu.VMEM((tq, hd), jnp.float32),        # running P@V accumulator
        ],
        compiler_params=pltpu.CompilerParams(
            # batch & q-tile axes are independent (shardable across v7x's 2 TCs);
            # kv-tile axis carries the online-softmax reduction.
            dimension_semantics=("parallel", "parallel", "arbitrary")),
        cost_estimate=cost,
    )(query, key, value, wq, wk, wv, bq, bk, bv, wo, bo)


def base_attention_ref(query, key, value, params):
    """Plain-JAX reference reproducing the PyTorch forward exactly."""
    d_head = params["W_Q"].shape[-1]
    scale = np.sqrt(d_head)
    q = jnp.einsum("bsm,hmd->bshd", query, params["W_Q"]) + params["b_Q"][None, None]
    k = jnp.einsum("bsm,hmd->bshd", key, params["W_K"]) + params["b_K"][None, None]
    v = jnp.einsum("bsm,hmd->bshd", value, params["W_V"]) + params["b_V"][None, None]
    s = jnp.einsum("bqhd,bkhd->bhqk", q, k) / scale
    p = jax.nn.softmax(s, axis=-1)
    p = jnp.where(jnp.isnan(p), jnp.zeros_like(p), p)
    z = jnp.einsum("bhqk,bkhd->bqhd", p, v)
    out = jnp.einsum("bqhd,hdm->bqm", z, params["W_O"]) + params["b_O"][None, None]
    return out


def _make_params(rng, d_model, d_head, n_heads):
    k_q, k_k, k_v, k_o, k_bq, k_bk, k_bv, k_bo = jax.random.split(rng, 8)
    return {
        "W_Q": jax.random.normal(k_q, (n_heads, d_model, d_head), jnp.float32) * 0.1,
        "W_K": jax.random.normal(k_k, (n_heads, d_model, d_head), jnp.float32) * 0.1,
        "W_V": jax.random.normal(k_v, (n_heads, d_model, d_head), jnp.float32) * 0.1,
        "b_Q": jax.random.normal(k_bq, (n_heads, d_head), jnp.float32) * 0.1,
        "b_K": jax.random.normal(k_bk, (n_heads, d_head), jnp.float32) * 0.1,
        "b_V": jax.random.normal(k_bv, (n_heads, d_head), jnp.float32) * 0.1,
        "W_O": jax.random.normal(k_o, (n_heads, d_head, d_model), jnp.float32) * 0.1,
        "b_O": jax.random.normal(k_bo, (d_model,), jnp.float32) * 0.1,
    }


def _run_case(rng, B, S, d_model, n_heads, d_head):
    k_p, k_x1, k_x2, k_x3 = jax.random.split(rng, 4)
    params = _make_params(k_p, d_model, d_head, n_heads)
    query = jax.random.normal(k_x1, (B, S, d_model), jnp.float32)
    key_in = jax.random.normal(k_x2, (B, S, d_model), jnp.float32)
    value = jax.random.normal(k_x3, (B, S, d_model), jnp.float32)

    out = jax.block_until_ready(base_attention(query, key_in, value, params))
    ref = jax.block_until_ready(base_attention_ref(query, key_in, value, params))
    np.testing.assert_allclose(np.asarray(out), np.asarray(ref), rtol=1e-4, atol=1e-5)


if __name__ == "__main__":
    root = jax.random.PRNGKey(0)
    k1, k2 = jax.random.split(root, 2)

    # Small shapes consistent with the module's forward (single kv tile).
    _run_case(k1, B=2, S=8, d_model=32, n_heads=4, d_head=8)
    # Longer sequence exercising the flash-style multi-tile path (nq=2, nk=2).
    _run_case(k2, B=2, S=256, d_model=32, n_heads=4, d_head=8)

    print("KERNEL_OK")
</pallas_src>

<mosaic_0001>
module attributes {stable_mosaic.version = 11 : i64} {
  func.func @base_attention_kernel(%arg0: i32, %arg1: i32, %arg2: i32, %arg3: memref<1x8x32xf32, #tpu.memory_space<vmem>>, %arg4: memref<1x8x32xf32, #tpu.memory_space<vmem>>, %arg5: memref<1x8x32xf32, #tpu.memory_space<vmem>>, %arg6: memref<32x32xf32, #tpu.memory_space<vmem>>, %arg7: memref<32x32xf32, #tpu.memory_space<vmem>>, %arg8: memref<32x32xf32, #tpu.memory_space<vmem>>, %arg9: memref<1x32xf32, #tpu.memory_space<vmem>>, %arg10: memref<1x32xf32, #tpu.memory_space<vmem>>, %arg11: memref<1x32xf32, #tpu.memory_space<vmem>>, %arg12: memref<32x32xf32, #tpu.memory_space<vmem>>, %arg13: memref<1x32xf32, #tpu.memory_space<vmem>>, %arg14: memref<1x8x32xf32, #tpu.memory_space<vmem>>, %arg15: memref<8x32xf32, #tpu.memory_space<vmem>>, %arg16: memref<8x4xf32, #tpu.memory_space<vmem>>, %arg17: memref<8x4xf32, #tpu.memory_space<vmem>>, %arg18: memref<8x32xf32, #tpu.memory_space<vmem>>) attributes {dimension_semantics = [#tpu.dimension_semantics<parallel>, #tpu.dimension_semantics<parallel>, #tpu.dimension_semantics<arbitrary>], iteration_bounds = array<i64: 2, 1, 1>, scalar_prefetch = 0 : i64, scratch_operands = 4 : i64, tpu.core_type = #tpu.core_type<tc>, window_params = [{transform_indices = @transform_0, window_bounds = array<i64: 1, 8, 32>}, {transform_indices = @transform_1, window_bounds = array<i64: 1, 8, 32>}, {transform_indices = @transform_2, window_bounds = array<i64: 1, 8, 32>}, {pipeline_mode = #tpu.pipeline_mode<synchronous>, transform_indices = @transform_3, window_bounds = array<i64: 32, 32>}, {pipeline_mode = #tpu.pipeline_mode<synchronous>, transform_indices = @transform_4, window_bounds = array<i64: 32, 32>}, {pipeline_mode = #tpu.pipeline_mode<synchronous>, transform_indices = @transform_5, window_bounds = array<i64: 32, 32>}, {pipeline_mode = #tpu.pipeline_mode<synchronous>, transform_indices = @transform_6, window_bounds = array<i64: 1, 32>}, {pipeline_mode = #tpu.pipeline_mode<synchronous>, transform_indices = @transform_7, window_bounds = array<i64: 1, 32>}, {pipeline_mode = #tpu.pipeline_mode<synchronous>, transform_indices = @transform_8, window_bounds = array<i64: 1, 32>}, {pipeline_mode = #tpu.pipeline_mode<synchronous>, transform_indices = @transform_9, window_bounds = array<i64: 32, 32>}, {pipeline_mode = #tpu.pipeline_mode<synchronous>, transform_indices = @transform_10, window_bounds = array<i64: 1, 32>}, {transform_indices = @transform_11, window_bounds = array<i64: 1, 8, 32>}]} {
    %c0_i32 = arith.constant 0 : i32
    %0 = arith.cmpi eq, %arg2, %c0_i32 : i32
    %1 = arith.extui %0 : i1 to i32
    %c0_i32_0 = arith.constant 0 : i32
    %2 = arith.cmpi ne, %1, %c0_i32_0 : i32
    scf.if %2 {
      %c0_77 = arith.constant 0 : index
      %c0_78 = arith.constant 0 : index
      %c0_79 = arith.constant 0 : index
      %125 = vector.load %arg3[%c0_77, %c0_78, %c0_79] : memref<1x8x32xf32, #tpu.memory_space<vmem>>, vector<1x8x32xf32>
      %126 = vector.shape_cast %125 : vector<1x8x32xf32> to vector<8x32xf32>
      %c0_80 = arith.constant 0 : index
      %c0_81 = arith.constant 0 : index
      %127 = vector.load %arg6[%c0_80, %c0_81] : memref<32x32xf32, #tpu.memory_space<vmem>>, vector<32x32xf32>
      %cst_82 = arith.constant dense<0.000000e+00> : vector<8x32xf32>
      %128 = tpu.matmul %126, %127, %cst_82 {dimension_numbers = #tpu.dot_dimension_numbers<[1], [0], [0], [1], [0, 0, 1, 1], [], []>} : vector<8x32xf32>, vector<32x32xf32>, vector<8x32xf32> -> vector<8x32xf32>
      %c0_83 = arith.constant 0 : index
      %c0_84 = arith.constant 0 : index
      %129 = vector.load %arg9[%c0_83, %c0_84] : memref<1x32xf32, #tpu.memory_space<vmem>>, vector<1x32xf32>
      %130 = vector.broadcast %129 : vector<1x32xf32> to vector<8x32xf32>
      %131 = arith.addf %128, %130 : vector<8x32xf32>
      %cst_85 = arith.constant 0.353553385 : f32
      %132 = vector.broadcast %cst_85 : f32 to vector<8x32xf32>
      %133 = arith.mulf %131, %132 : vector<8x32xf32>
      %c0_86 = arith.constant 0 : index
      %c0_87 = arith.constant 0 : index
      %134 = vector.load %arg15[%c0_86, %c0_87] : memref<8x32xf32, #tpu.memory_space<vmem>>, vector<8x32xf32>
      tpu.vector_store %arg15[%c0_86, %c0_87], %133 {strides = array<i32>} : memref<8x32xf32, #tpu.memory_space<vmem>>, vector<8x32xf32>,
      %cst_88 = arith.constant 0xFF800000 : f32
      %135 = vector.broadcast %cst_88 : f32 to vector<8x4xf32>
      %c0_89 = arith.constant 0 : index
      %c0_90 = arith.constant 0 : index
      %136 = vector.load %arg16[%c0_89, %c0_90] : memref<8x4xf32, #tpu.memory_space<vmem>>, vector<8x4xf32>
      tpu.vector_store %arg16[%c0_89, %c0_90], %135 {strides = array<i32>} : memref<8x4xf32, #tpu.memory_space<vmem>>, vector<8x4xf32>,
      %cst_91 = arith.constant 0.000000e+00 : f32
      %137 = vector.broadcast %cst_91 : f32 to vector<8x4xf32>
      %c0_92 = arith.constant 0 : index
      %c0_93 = arith.constant 0 : index
      %138 = vector.load %arg17[%c0_92, %c0_93] : memref<8x4xf32, #tpu.memory_space<vmem>>, vector<8x4xf32>
      tpu.vector_store %arg17[%c0_92, %c0_93], %137 {strides = array<i32>} : memref<8x4xf32, #tpu.memory_space<vmem>>, vector<8x4xf32>,
      %cst_94 = arith.constant 0.000000e+00 : f32
      %139 = vector.broadcast %cst_94 : f32 to vector<8x32xf32>
      %c0_95 = arith.constant 0 : index
      %c0_96 = arith.constant 0 : index
      %140 = vector.load %arg18[%c0_95, %c0_96] : memref<8x32xf32, #tpu.memory_space<vmem>>, vector<8x32xf32>
      tpu.vector_store %arg18[%c0_95, %c0_96], %139 {strides = array<i32>} : memref<8x32xf32, #tpu.memory_space<vmem>>, vector<8x32xf32>,
    } else {
    }
    %c0 = arith.constant 0 : index
    %c0_1 = arith.constant 0 : index
    %c0_2 = arith.constant 0 : index
    %3 = vector.load %arg4[%c0, %c0_1, %c0_2] : memref<1x8x32xf32, #tpu.memory_space<vmem>>, vector<1x8x32xf32>
    %4 = vector.shape_cast %3 : vector<1x8x32xf32> to vector<8x32xf32>
    %c0_3 = arith.constant 0 : index
    %c0_4 = arith.constant 0 : index
    %c0_5 = arith.constant 0 : index
    %5 = vector.load %arg5[%c0_3, %c0_4, %c0_5] : memref<1x8x32xf32, #tpu.memory_space<vmem>>, vector<1x8x32xf32>
    %6 = vector.shape_cast %5 : vector<1x8x32xf32> to vector<8x32xf32>
    %c0_6 = arith.constant 0 : index
    %c0_7 = arith.constant 0 : index
    %7 = vector.load %arg7[%c0_6, %c0_7] : memref<32x32xf32, #tpu.memory_space<vmem>>, vector<32x32xf32>
    %cst = arith.constant dense<0.000000e+00> : vector<8x32xf32>
    %8 = tpu.matmul %4, %7, %cst {dimension_numbers = #tpu.dot_dimension_numbers<[1], [0], [0], [1], [0, 0, 1, 1], [], []>} : vector<8x32xf32>, vector<32x32xf32>, vector<8x32xf32> -> vector<8x32xf32>
    %c0_8 = arith.constant 0 : index
    %c0_9 = arith.constant 0 : index
    %9 = vector.load %arg10[%c0_8, %c0_9] : memref<1x32xf32, #tpu.memory_space<vmem>>, vector<1x32xf32>
    %10 = vector.broadcast %9 : vector<1x32xf32> to vector<8x32xf32>
    %11 = arith.addf %8, %10 : vector<8x32xf32>
    %c0_10 = arith.constant 0 : index
    %c0_11 = arith.constant 0 : index
    %12 = vector.load %arg8[%c0_10, %c0_11] : memref<32x32xf32, #tpu.memory_space<vmem>>, vector<32x32xf32>
    %cst_12 = arith.constant dense<0.000000e+00> : vector<8x32xf32>
    %13 = tpu.matmul %6, %12, %cst_12 {dimension_numbers = #tpu.dot_dimension_numbers<[1], [0], [0], [1], [0, 0, 1, 1], [], []>} : vector<8x32xf32>, vector<32x32xf32>, vector<8x32xf32> -> vector<8x32xf32>
    %c0_13 = arith.constant 0 : index
    %c0_14 = arith.constant 0 : index
    %14 = vector.load %arg11[%c0_13, %c0_14] : memref<1x32xf32, #tpu.memory_space<vmem>>, vector<1x32xf32>
    %15 = vector.broadcast %14 : vector<1x32xf32> to vector<8x32xf32>
    %16 = arith.addf %13, %15 : vector<8x32xf32>
    %c0_15 = arith.constant 0 : index
    %c0_16 = arith.constant 0 : index
    %17 = vector.load %arg15[%c0_15, %c0_16] : memref<8x32xf32, #tpu.memory_space<vmem>>, vector<8x32xf32>
    %18 = vector.extract_strided_slice %17 {offsets = [0, 0], sizes = [8, 8], strides = [1, 1]} : vector<8x32xf32> to vector<8x8xf32>
    %19 = vector.extract_strided_slice %11 {offsets = [0, 0], sizes = [8, 8], strides = [1, 1]} : vector<8x32xf32> to vector<8x8xf32>
    %20 = vector.extract_strided_slice %16 {offsets = [0, 0], sizes = [8, 8], strides = [1, 1]} : vector<8x32xf32> to vector<8x8xf32>
    %cst_17 = arith.constant dense<0.000000e+00> : vector<8x8xf32>
    %21 = tpu.matmul %18, %19, %cst_17 {dimension_numbers = #tpu.dot_dimension_numbers<[1], [1], [0], [0], [0, 0, 1, 0], [], []>} : vector<8x8xf32>, vector<8x8xf32>, vector<8x8xf32> -> vector<8x8xf32>
    %c0_18 = arith.constant 0 : index
    %c0_19 = arith.constant 0 : index
    %22 = vector.load %arg16[%c0_18, %c0_19] : memref<8x4xf32, #tpu.memory_space<vmem>>, vector<8x1xf32>
    %cst_20 = arith.constant dense<0xFF800000> : vector<8xf32>
    %23 = vector.multi_reduction <maximumf>, %21, %cst_20 [1] : vector<8x8xf32> to vector<8xf32>
    %24 = vector.shape_cast %23 : vector<8xf32> to vector<8x1xf32>
    %25 = arith.maximumf %22, %24 : vector<8x1xf32>
    %26 = arith.subf %22, %25 : vector<8x1xf32>
    %27 = math.exp %26 : vector<8x1xf32>
    %28 = vector.broadcast %25 : vector<8x1xf32> to vector<8x8xf32>
    %29 = arith.subf %21, %28 : vector<8x8xf32>
    %30 = math.exp %29 : vector<8x8xf32>
    %c0_21 = arith.constant 0 : index
    %c0_22 = arith.constant 0 : index
    %31 = vector.load %arg17[%c0_21, %c0_22] : memref<8x4xf32, #tpu.memory_space<vmem>>, vector<8x1xf32>
    %32 = arith.mulf %27, %31 : vector<8x1xf32>
    %cst_23 = arith.constant dense<0.000000e+00> : vector<8xf32>
    %33 = vector.multi_reduction <add>, %30, %cst_23 [1] : vector<8x8xf32> to vector<8xf32>
    %34 = vector.shape_cast %33 : vector<8xf32> to vector<8x1xf32>
    %35 = arith.addf %32, %34 : vector<8x1xf32>
    %c0_24 = arith.constant 0 : index
    %c0_25 = arith.constant 0 : index
    %36 = vector.load %arg17[%c0_24, %c0_25] : memref<8x4xf32, #tpu.memory_space<vmem>>, vector<8x1xf32>
    tpu.vector_store %arg17[%c0_24, %c0_25], %35 {strides = array<i32>} : memref<8x4xf32, #tpu.memory_space<vmem>>, vector<8x1xf32>,
    %c0_26 = arith.constant 0 : index
    %c0_27 = arith.constant 0 : index
    %37 = vector.load %arg18[%c0_26, %c0_27] : memref<8x32xf32, #tpu.memory_space<vmem>>, vector<8x8xf32>
    %38 = vector.broadcast %27 : vector<8x1xf32> to vector<8x8xf32>
    %39 = arith.mulf %38, %37 : vector<8x8xf32>
    %cst_28 = arith.constant dense<0.000000e+00> : vector<8x8xf32>
    %40 = tpu.matmul %30, %20, %cst_28 {dimension_numbers = #tpu.dot_dimension_numbers<[1], [0], [0], [1], [0, 0, 1, 1], [], []>} : vector<8x8xf32>, vector<8x8xf32>, vector<8x8xf32> -> vector<8x8xf32>
    %41 = arith.addf %39, %40 : vector<8x8xf32>
    %c0_29 = arith.constant 0 : index
    %c0_30 = arith.constant 0 : index
    %42 = vector.load %arg18[%c0_29, %c0_30] : memref<8x32xf32, #tpu.memory_space<vmem>>, vector<8x8xf32>
    tpu.vector_store %arg18[%c0_29, %c0_30], %41 {strides = array<i32>} : memref<8x32xf32, #tpu.memory_space<vmem>>, vector<8x8xf32>,
    %c0_31 = arith.constant 0 : index
    %c0_32 = arith.constant 0 : index
    %43 = vector.load %arg16[%c0_31, %c0_32] : memref<8x4xf32, #tpu.memory_space<vmem>>, vector<8x1xf32>
    tpu.vector_store %arg16[%c0_31, %c0_32], %25 {strides = array<i32>} : memref<8x4xf32, #tpu.memory_space<vmem>>, vector<8x1xf32>,
    %44 = vector.extract_strided_slice %17 {offsets = [0, 8], sizes = [8, 8], strides = [1, 1]} : vector<8x32xf32> to vector<8x8xf32>
    %45 = vector.extract_strided_slice %11 {offsets = [0, 8], sizes = [8, 8], strides = [1, 1]} : vector<8x32xf32> to vector<8x8xf32>
    %46 = vector.extract_strided_slice %16 {offsets = [0, 8], sizes = [8, 8], strides = [1, 1]} : vector<8x32xf32> to vector<8x8xf32>
    %cst_33 = arith.constant dense<0.000000e+00> : vector<8x8xf32>
    %47 = tpu.matmul %44, %45, %cst_33 {dimension_numbers = #tpu.dot_dimension_numbers<[1], [1], [0], [0], [0, 0, 1, 0], [], []>} : vector<8x8xf32>, vector<8x8xf32>, vector<8x8xf32> -> vector<8x8xf32>
    %c0_34 = arith.constant 0 : index
    %c1 = arith.constant 1 : index
    %48 = vector.load %arg16[%c0_34, %c1] : memref<8x4xf32, #tpu.memory_space<vmem>>, vector<8x1xf32>
    %cst_35 = arith.constant dense<0xFF800000> : vector<8xf32>
    %49 = vector.multi_reduction <maximumf>, %47, %cst_35 [1] : vector<8x8xf32> to vector<8xf32>
    %50 = vector.shape_cast %49 : vector<8xf32> to vector<8x1xf32>
    %51 = arith.maximumf %48, %50 : vector<8x1xf32>
    %52 = arith.subf %48, %51 : vector<8x1xf32>
    %53 = math.exp %52 : vector<8x1xf32>
    %54 = vector.broadcast %51 : vector<8x1xf32> to vector<8x8xf32>
    %55 = arith.subf %47, %54 : vector<8x8xf32>
    %56 = math.exp %55 : vector<8x8xf32>
    %c0_36 = arith.constant 0 : index
    %c1_37 = arith.constant 1 : index
    %57 = vector.load %arg17[%c0_36, %c1_37] : memref<8x4xf32, #tpu.memory_space<vmem>>, vector<8x1xf32>
    %58 = arith.mulf %53, %57 : vector<8x1xf32>
    %cst_38 = arith.constant dense<0.000000e+00> : vector<8xf32>
    %59 = vector.multi_reduction <add>, %56, %cst_38 [1] : vector<8x8xf32> to vector<8xf32>
    %60 = vector.shape_cast %59 : vector<8xf32> to vector<8x1xf32>
    %61 = arith.addf %58, %60 : vector<8x1xf32>
    %c0_39 = arith.constant 0 : index
    %c1_40 = arith.constant 1 : index
    %62 = vector.load %arg17[%c0_39, %c1_40] : memref<8x4xf32, #tpu.memory_space<vmem>>, vector<8x1xf32>
    tpu.vector_store %arg17[%c0_39, %c1_40], %61 {strides = array<i32>} : memref<8x4xf32, #tpu.memory_space<vmem>>, vector<8x1xf32>,
    %c0_41 = arith.constant 0 : index
    %c8 = arith.constant 8 : index
    %63 = vector.load %arg18[%c0_41, %c8] : memref<8x32xf32, #tpu.memory_space<vmem>>, vector<8x8xf32>
    %64 = vector.broadcast %53 : vector<8x1xf32> to vector<8x8xf32>
    %65 = arith.mulf %64, %63 : vector<8x8xf32>
    %cst_42 = arith.constant dense<0.000000e+00> : vector<8x8xf32>
    %66 = tpu.matmul %56, %46, %cst_42 {dimension_numbers = #tpu.dot_dimension_numbers<[1], [0], [0], [1], [0, 0, 1, 1], [], []>} : vector<8x8xf32>, vector<8x8xf32>, vector<8x8xf32> -> vector<8x8xf32>
    %67 = arith.addf %65, %66 : vector<8x8xf32>
    %c0_43 = arith.constant 0 : index
    %c8_44 = arith.constant 8 : index
    %68 = vector.load %arg18[%c0_43, %c8_44] : memref<8x32xf32, #tpu.memory_space<vmem>>, vector<8x8xf32>
    tpu.vector_store %arg18[%c0_43, %c8_44], %67 {strides = array<i32>} : memref<8x32xf32, #tpu.memory_space<vmem>>, vector<8x8xf32>,
    %c0_45 = arith.constant 0 : index
    %c1_46 = arith.constant 1 : index
    %69 = vector.load %arg16[%c0_45, %c1_46] : memref<8x4xf32, #tpu.memory_space<vmem>>, vector<8x1xf32>
    tpu.vector_store %arg16[%c0_45, %c1_46], %51 {strides = array<i32>} : memref<8x4xf32, #tpu.memory_space<vmem>>, vector<8x1xf32>,
    %70 = vector.extract_strided_slice %17 {offsets = [0, 16], sizes = [8, 8], strides = [1, 1]} : vector<8x32xf32> to vector<8x8xf32>
    %71 = vector.extract_strided_slice %11 {offsets = [0, 16], sizes = [8, 8], strides = [1, 1]} : vector<8x32xf32> to vector<8x8xf32>
    %72 = vector.extract_strided_slice %16 {offsets = [0, 16], sizes = [8, 8], strides = [1, 1]} : vector<8x32xf32> to vector<8x8xf32>
    %cst_47 = arith.constant dense<0.000000e+00> : vector<8x8xf32>
    %73 = tpu.matmul %70, %71, %cst_47 {dimension_numbers = #tpu.dot_dimension_numbers<[1], [1], [0], [0], [0, 0, 1, 0], [], []>} : vector<8x8xf32>, vector<8x8xf32>, vector<8x8xf32> -> vector<8x8xf32>
    %c0_48 = arith.constant 0 : index
    %c2 = arith.constant 2 : index
    %74 = vector.load %arg16[%c0_48, %c2] : memref<8x4xf32, #tpu.memory_space<vmem>>, vector<8x1xf32>
    %cst_49 = arith.constant dense<0xFF800000> : vector<8xf32>
    %75 = vector.multi_reduction <maximumf>, %73, %cst_49 [1] : vector<8x8xf32> to vector<8xf32>
    %76 = vector.shape_cast %75 : vector<8xf32> to vector<8x1xf32>
    %77 = arith.maximumf %74, %76 : vector<8x1xf32>
    %78 = arith.subf %74, %77 : vector<8x1xf32>
    %79 = math.exp %78 : vector<8x1xf32>
    %80 = vector.broadcast %77 : vector<8x1xf32> to vector<8x8xf32>
    %81 = arith.subf %73, %80 : vector<8x8xf32>
    %82 = math.exp %81 : vector<8x8xf32>
    %c0_50 = arith.constant 0 : index
    %c2_51 = arith.constant 2 : index
    %83 = vector.load %arg17[%c0_50, %c2_51] : memref<8x4xf32, #tpu.memory_space<vmem>>, vector<8x1xf32>
    %84 = arith.mulf %79, %83 : vector<8x1xf32>
    %cst_52 = arith.constant dense<0.000000e+00> : vector<8xf32>
    %85 = vector.multi_reduction <add>, %82, %cst_52 [1] : vector<8x8xf32> to vector<8xf32>
    %86 = vector.shape_cast %85 : vector<8xf32> to vector<8x1xf32>
    %87 = arith.addf %84, %86 : vector<8x1xf32>
    %c0_53 = arith.constant 0 : index
    %c2_54 = arith.constant 2 : index
    %88 = vector.load %arg17[%c0_53, %c2_54] : memref<8x4xf32, #tpu.memory_space<vmem>>, vector<8x1xf32>
    tpu.vector_store %arg17[%c0_53, %c2_54], %87 {strides = array<i32>} : memref<8x4xf32, #tpu.memory_space<vmem>>, vector<8x1xf32>,
    %c0_55 = arith.constant 0 : index
    %c16 = arith.constant 16 : index
    %89 = vector.load %arg18[%c0_55, %c16] : memref<8x32xf32, #tpu.memory_space<vmem>>, vector<8x8xf32>
    %90 = vector.broadcast %79 : vector<8x1xf32> to vector<8x8xf32>
    %91 = arith.mulf %90, %89 : vector<8x8xf32>
    %cst_56 = arith.constant dense<0.000000e+00> : vector<8x8xf32>
    %92 = tpu.matmul %82, %72, %cst_56 {dimension_numbers = #tpu.dot_dimension_numbers<[1], [0], [0], [1], [0, 0, 1, 1], [], []>} : vector<8x8xf32>, vector<8x8xf32>, vector<8x8xf32> -> vector<8x8xf32>
    %93 = arith.addf %91, %92 : vector<8x8xf32>
    %c0_57 = arith.constant 0 : index
    %c16_58 = arith.constant 16 : index
    %94 = vector.load %arg18[%c0_57, %c16_58] : memref<8x32xf32, #tpu.memory_space<vmem>>, vector<8x8xf32>
    tpu.vector_store %arg18[%c0_57, %c16_58], %93 {strides = array<i32>} : memref<8x32xf32, #tpu.memory_space<vmem>>, vector<8x8xf32>,
    %c0_59 = arith.constant 0 : index
    %c2_60 = arith.constant 2 : index
    %95 = vector.load %arg16[%c0_59, %c2_60] : memref<8x4xf32, #tpu.memory_space<vmem>>, vector<8x1xf32>
    tpu.vector_store %arg16[%c0_59, %c2_60], %77 {strides = array<i32>} : memref<8x4xf32, #tpu.memory_space<vmem>>, vector<8x1xf32>,
    %96 = vector.extract_strided_slice %17 {offsets = [0, 24], sizes = [8, 8], strides = [1, 1]} : vector<8x32xf32> to vector<8x8xf32>
    %97 = vector.extract_strided_slice %11 {offsets = [0, 24], sizes = [8, 8], strides = [1, 1]} : vector<8x32xf32> to vector<8x8xf32>
    %98 = vector.extract_strided_slice %16 {offsets = [0, 24], sizes = [8, 8], strides = [1, 1]} : vector<8x32xf32> to vector<8x8xf32>
    %cst_61 = arith.constant dense<0.000000e+00> : vector<8x8xf32>
    %99 = tpu.matmul %96, %97, %cst_61 {dimension_numbers = #tpu.dot_dimension_numbers<[1], [1], [0], [0], [0, 0, 1, 0], [], []>} : vector<8x8xf32>, vector<8x8xf32>, vector<8x8xf32> -> vector<8x8xf32>
    %c0_62 = arith.constant 0 : index
    %c3 = arith.constant 3 : index
    %100 = vector.load %arg16[%c0_62, %c3] : memref<8x4xf32, #tpu.memory_space<vmem>>, vector<8x1xf32>
    %cst_63 = arith.constant dense<0xFF800000> : vector<8xf32>
    %101 = vector.multi_reduction <maximumf>, %99, %cst_63 [1] : vector<8x8xf32> to vector<8xf32>
    %102 = vector.shape_cast %101 : vector<8xf32> to vector<8x1xf32>
    %103 = arith.maximumf %100, %102 : vector<8x1xf32>
    %104 = arith.subf %100, %103 : vector<8x1xf32>
    %105 = math.exp %104 : vector<8x1xf32>
    %106 = vector.broadcast %103 : vector<8x1xf32> to vector<8x8xf32>
    %107 = arith.subf %99, %106 : vector<8x8xf32>
    %108 = math.exp %107 : vector<8x8xf32>
    %c0_64 = arith.constant 0 : index
    %c3_65 = arith.constant 3 : index
    %109 = vector.load %arg17[%c0_64, %c3_65] : memref<8x4xf32, #tpu.memory_space<vmem>>, vector<8x1xf32>
    %110 = arith.mulf %105, %109 : vector<8x1xf32>
    %cst_66 = arith.constant dense<0.000000e+00> : vector<8xf32>
    %111 = vector.multi_reduction <add>, %108, %cst_66 [1] : vector<8x8xf32> to vector<8xf32>
    %112 = vector.shape_cast %111 : vector<8xf32> to vector<8x1xf32>
    %113 = arith.addf %110, %112 : vector<8x1xf32>
    %c0_67 = arith.constant 0 : index
    %c3_68 = arith.constant 3 : index
    %114 = vector.load %arg17[%c0_67, %c3_68] : memref<8x4xf32, #tpu.memory_space<vmem>>, vector<8x1xf32>
    tpu.vector_store %arg17[%c0_67, %c3_68], %113 {strides = array<i32>} : memref<8x4xf32, #tpu.memory_space<vmem>>, vector<8x1xf32>,
    %c0_69 = arith.constant 0 : index
    %c24 = arith.constant 24 : index
    %115 = vector.load %arg18[%c0_69, %c24] : memref<8x32xf32, #tpu.memory_space<vmem>>, vector<8x8xf32>
    %116 = vector.broadcast %105 : vector<8x1xf32> to vector<8x8xf32>
    %117 = arith.mulf %116, %115 : vector<8x8xf32>
    %cst_70 = arith.constant dense<0.000000e+00> : vector<8x8xf32>
    %118 = tpu.matmul %108, %98, %cst_70 {dimension_numbers = #tpu.dot_dimension_numbers<[1], [0], [0], [1], [0, 0, 1, 1], [], []>} : vector<8x8xf32>, vector<8x8xf32>, vector<8x8xf32> -> vector<8x8xf32>
    %119 = arith.addf %117, %118 : vector<8x8xf32>
    %c0_71 = arith.constant 0 : index
    %c24_72 = arith.constant 24 : index
    %120 = vector.load %arg18[%c0_71, %c24_72] : memref<8x32xf32, #tpu.memory_space<vmem>>, vector<8x8xf32>
    tpu.vector_store %arg18[%c0_71, %c24_72], %119 {strides = array<i32>} : memref<8x32xf32, #tpu.memory_space<vmem>>, vector<8x8xf32>,
    %c0_73 = arith.constant 0 : index
    %c3_74 = arith.constant 3 : index
    %121 = vector.load %arg16[%c0_73, %c3_74] : memref<8x4xf32, #tpu.memory_space<vmem>>, vector<8x1xf32>
    tpu.vector_store %arg16[%c0_73, %c3_74], %103 {strides = array<i32>} : memref<8x4xf32, #tpu.memory_space<vmem>>, vector<8x1xf32>,
    %c0_i32_75 = arith.constant 0 : i32
    %122 = arith.cmpi eq, %arg2, %c0_i32_75 : i32
    %123 = arith.extui %122 : i1 to i32
    %c0_i32_76 = arith.constant 0 : i32
    %124 = arith.cmpi ne, %123, %c0_i32_76 : i32
    scf.if %124 {
      %c0_77 = arith.constant 0 : index
      %c0_78 = arith.constant 0 : index
      %125 = vector.load %arg17[%c0_77, %c0_78] : memref<8x4xf32, #tpu.memory_space<vmem>>, vector<8x1xf32>
      %126 = arith.cmpf one, %125, %125 : vector<8x1xf32>
      %127 = tpu.reciprocal %125 : vector<8x1xf32> -> vector<8x1xf32>
      %c0_79 = arith.constant 0 : index
      %c0_80 = arith.constant 0 : index
      %128 = vector.load %arg18[%c0_79, %c0_80] : memref<8x32xf32, #tpu.memory_space<vmem>>, vector<8x8xf32>
      %129 = vector.broadcast %127 : vector<8x1xf32> to vector<8x8xf32>
      %130 = arith.mulf %128, %129 : vector<8x8xf32>
      %cst_81 = arith.constant 0.000000e+00 : f32
      %131 = vector.shape_cast %126 : vector<8x1xi1> to vector<8x1xi1>
      %132 = vector.broadcast %131 : vector<8x1xi1> to vector<8x8xi1>
      %133 = vector.broadcast %cst_81 : f32 to vector<8x8xf32>
      %134 = arith.select %132, %133, %130 : vector<8x8xi1>, vector<8x8xf32>
      %c0_82 = arith.constant 0 : index
      %c0_83 = arith.constant 0 : index
      %135 = vector.load %arg18[%c0_82, %c0_83] : memref<8x32xf32, #tpu.memory_space<vmem>>, vector<8x8xf32>
      tpu.vector_store %arg18[%c0_82, %c0_83], %134 {strides = array<i32>} : memref<8x32xf32, #tpu.memory_space<vmem>>, vector<8x8xf32>,
      %c0_84 = arith.constant 0 : index
      %c1_85 = arith.constant 1 : index
      %136 = vector.load %arg17[%c0_84, %c1_85] : memref<8x4xf32, #tpu.memory_space<vmem>>, vector<8x1xf32>
      %137 = arith.cmpf one, %136, %136 : vector<8x1xf32>
      %138 = tpu.reciprocal %136 : vector<8x1xf32> -> vector<8x1xf32>
      %c0_86 = arith.constant 0 : index
      %c8_87 = arith.constant 8 : index
      %139 = vector.load %arg18[%c0_86, %c8_87] : memref<8x32xf32, #tpu.memory_space<vmem>>, vector<8x8xf32>
      %140 = vector.broadcast %138 : vector<8x1xf32> to vector<8x8xf32>
      %141 = arith.mulf %139, %140 : vector<8x8xf32>
      %cst_88 = arith.constant 0.000000e+00 : f32
      %142 = vector.shape_cast %137 : vector<8x1xi1> to vector<8x1xi1>
      %143 = vector.broadcast %142 : vector<8x1xi1> to vector<8x8xi1>
      %144 = vector.broadcast %cst_88 : f32 to vector<8x8xf32>
      %145 = arith.select %143, %144, %141 : vector<8x8xi1>, vector<8x8xf32>
      %c0_89 = arith.constant 0 : index
      %c8_90 = arith.constant 8 : index
      %146 = vector.load %arg18[%c0_89, %c8_90] : memref<8x32xf32, #tpu.memory_space<vmem>>, vector<8x8xf32>
      tpu.vector_store %arg18[%c0_89, %c8_90], %145 {strides = array<i32>} : memref<8x32xf32, #tpu.memory_space<vmem>>, vector<8x8xf32>,
      %c0_91 = arith.constant 0 : index
      %c2_92 = arith.constant 2 : index
      %147 = vector.load %arg17[%c0_91, %c2_92] : memref<8x4xf32, #tpu.memory_space<vmem>>, vector<8x1xf32>
      %148 = arith.cmpf one, %147, %147 : vector<8x1xf32>
      %149 = tpu.reciprocal %147 : vector<8x1xf32> -> vector<8x1xf32>
      %c0_93 = arith.constant 0 : index
      %c16_94 = arith.constant 16 : index
      %150 = vector.load %arg18[%c0_93, %c16_94] : memref<8x32xf32, #tpu.memory_space<vmem>>, vector<8x8xf32>
      %151 = vector.broadcast %149 : vector<8x1xf32> to vector<8x8xf32>
      %152 = arith.mulf %150, %151 : vector<8x8xf32>
      %cst_95 = arith.constant 0.000000e+00 : f32
      %153 = vector.shape_cast %148 : vector<8x1xi1> to vector<8x1xi1>
      %154 = vector.broadcast %153 : vector<8x1xi1> to vector<8x8xi1>
      %155 = vector.broadcast %cst_95 : f32 to vector<8x8xf32>
      %156 = arith.select %154, %155, %152 : vector<8x8xi1>, vector<8x8xf32>
      %c0_96 = arith.constant 0 : index
      %c16_97 = arith.constant 16 : index
      %157 = vector.load %arg18[%c0_96, %c16_97] : memref<8x32xf32, #tpu.memory_space<vmem>>, vector<8x8xf32>
      tpu.vector_store %arg18[%c0_96, %c16_97], %156 {strides = array<i32>} : memref<8x32xf32, #tpu.memory_space<vmem>>, vector<8x8xf32>,
      %c0_98 = arith.constant 0 : index
      %c3_99 = arith.constant 3 : index
      %158 = vector.load %arg17[%c0_98, %c3_99] : memref<8x4xf32, #tpu.memory_space<vmem>>, vector<8x1xf32>
      %159 = arith.cmpf one, %158, %158 : vector<8x1xf32>
      %160 = tpu.reciprocal %158 : vector<8x1xf32> -> vector<8x1xf32>
      %c0_100 = arith.constant 0 : index
      %c24_101 = arith.constant 24 : index
      %161 = vector.load %arg18[%c0_100, %c24_101] : memref<8x32xf32, #tpu.memory_space<vmem>>, vector<8x8xf32>
      %162 = vector.broadcast %160 : vector<8x1xf32> to vector<8x8xf32>
      %163 = arith.mulf %161, %162 : vector<8x8xf32>
      %cst_102 = arith.constant 0.000000e+00 : f32
      %164 = vector.shape_cast %159 : vector<8x1xi1> to vector<8x1xi1>
      %165 = vector.broadcast %164 : vector<8x1xi1> to vector<8x8xi1>
      %166 = vector.broadcast %cst_102 : f32 to vector<8x8xf32>
      %167 = arith.select %165, %166, %163 : vector<8x8xi1>, vector<8x8xf32>
      %c0_103 = arith.constant 0 : index
      %c24_104 = arith.constant 24 : index
      %168 = vector.load %arg18[%c0_103, %c24_104] : memref<8x32xf32, #tpu.memory_space<vmem>>, vector<8x8xf32>
      tpu.vector_store %arg18[%c0_103, %c24_104], %167 {strides = array<i32>} : memref<8x32xf32, #tpu.memory_space<vmem>>, vector<8x8xf32>,
      %c0_105 = arith.constant 0 : index
      %c0_106 = arith.constant 0 : index
      %169 = vector.load %arg18[%c0_105, %c0_106] : memref<8x32xf32, #tpu.memory_space<vmem>>, vector<8x32xf32>
      %c0_107 = arith.constant 0 : index
      %c0_108 = arith.constant 0 : index
      %170 = vector.load %arg12[%c0_107, %c0_108] : memref<32x32xf32, #tpu.memory_space<vmem>>, vector<32x32xf32>
      %cst_109 = arith.constant dense<0.000000e+00> : vector<8x32xf32>
      %171 = tpu.matmul %169, %170, %cst_109 {dimension_numbers = #tpu.dot_dimension_numbers<[1], [0], [0], [1], [0, 0, 1, 1], [], []>} : vector<8x32xf32>, vector<32x32xf32>, vector<8x32xf32> -> vector<8x32xf32>
      %c0_110 = arith.constant 0 : index
      %c0_111 = arith.constant 0 : index
      %172 = vector.load %arg13[%c0_110, %c0_111] : memref<1x32xf32, #tpu.memory_space<vmem>>, vector<1x32xf32>
      %173 = vector.broadcast %172 : vector<1x32xf32> to vector<8x32xf32>
      %174 = arith.addf %171, %173 : vector<8x32xf32>
      %c0_112 = arith.constant 0 : index
      %c0_113 = arith.constant 0 : index
      %c0_114 = arith.constant 0 : index
      %175 = vector.load %arg14[%c0_112, %c0_113, %c0_114] : memref<1x8x32xf32, #tpu.memory_space<vmem>>, vector<1x8x32xf32>
      %176 = vector.shape_cast %175 : vector<1x8x32xf32> to vector<8x32xf32>
      %177 = vector.shape_cast %174 : vector<8x32xf32> to vector<1x8x32xf32>
      tpu.vector_store %arg14[%c0_112, %c0_113, %c0_114], %177 {strides = array<i32>} : memref<1x8x32xf32, #tpu.memory_space<vmem>>, vector<1x8x32xf32>,
    } else {
    }
    return
  }
  func.func @transform_0(%arg0: i32, %arg1: i32, %arg2: i32) -> (i32, i32, i32) {
    %c0_i32 = arith.constant 0 : i32
    %c0_i32_0 = arith.constant 0 : i32
    return %arg0, %arg1, %c0_i32 : i32, i32, i32
  }
  func.func @transform_1(%arg0: i32, %arg1: i32, %arg2: i32) -> (i32, i32, i32) {
    %c0_i32 = arith.constant 0 : i32
    %c0_i32_0 = arith.constant 0 : i32
    return %arg0, %arg2, %c0_i32 : i32, i32, i32
  }
  func.func @transform_2(%arg0: i32, %arg1: i32, %arg2: i32) -> (i32, i32, i32) {
    %c0_i32 = arith.constant 0 : i32
    %c0_i32_0 = arith.constant 0 : i32
    return %arg0, %arg2, %c0_i32 : i32, i32, i32
  }
  func.func @transform_3(%arg0: i32, %arg1: i32, %arg2: i32) -> (i32, i32) {
    %c0_i32 = arith.constant 0 : i32
    %c0_i32_0 = arith.constant 0 : i32
    %c0_i32_1 = arith.constant 0 : i32
    return %c0_i32, %c0_i32_0 : i32, i32
  }
  func.func @transform_4(%arg0: i32, %arg1: i32, %arg2: i32) -> (i32, i32) {
    %c0_i32 = arith.constant 0 : i32
    %c0_i32_0 = arith.constant 0 : i32
    %c0_i32_1 = arith.constant 0 : i32
    return %c0_i32, %c0_i32_0 : i32, i32
  }
  func.func @transform_5(%arg0: i32, %arg1: i32, %arg2: i32) -> (i32, i32) {
    %c0_i32 = arith.constant 0 : i32
    %c0_i32_0 = arith.constant 0 : i32
    %c0_i32_1 = arith.constant 0 : i32
    return %c0_i32, %c0_i32_0 : i32, i32
  }
  func.func @transform_6(%arg0: i32, %arg1: i32, %arg2: i32) -> (i32, i32) {
    %c0_i32 = arith.constant 0 : i32
    %c0_i32_0 = arith.constant 0 : i32
    %c0_i32_1 = arith.constant 0 : i32
    return %c0_i32, %c0_i32_0 : i32, i32
  }
  func.func @transform_7(%arg0: i32, %arg1: i32, %arg2: i32) -> (i32, i32) {
    %c0_i32 = arith.constant 0 : i32
    %c0_i32_0 = arith.constant 0 : i32
    %c0_i32_1 = arith.constant 0 : i32
    return %c0_i32, %c0_i32_0 : i32, i32
  }
  func.func @transform_8(%arg0: i32, %arg1: i32, %arg2: i32) -> (i32, i32) {
    %c0_i32 = arith.constant 0 : i32
    %c0_i32_0 = arith.constant 0 : i32
    %c0_i32_1 = arith.constant 0 : i32
    return %c0_i32, %c0_i32_0 : i32, i32
  }
  func.func @transform_9(%arg0: i32, %arg1: i32, %arg2: i32) -> (i32, i32) {
    %c0_i32 = arith.constant 0 : i32
    %c0_i32_0 = arith.constant 0 : i32
    %c0_i32_1 = arith.constant 0 : i32
    return %c0_i32, %c0_i32_0 : i32, i32
  }
  func.func @transform_10(%arg0: i32, %arg1: i32, %arg2: i32) -> (i32, i32) {
    %c0_i32 = arith.constant 0 : i32
    %c0_i32_0 = arith.constant 0 : i32
    %c0_i32_1 = arith.constant 0 : i32
    return %c0_i32, %c0_i32_0 : i32, i32
  }
  func.func @transform_11(%arg0: i32, %arg1: i32, %arg2: i32) -> (i32, i32, i32) {
    %c0_i32 = arith.constant 0 : i32
    %c0_i32_0 = arith.constant 0 : i32
    return %arg0, %arg1, %c0_i32 : i32, i32, i32
  }
}

</mosaic_0001>

<llo_original>
// kernel: tpu_custom_call.1
$region0: #{tpu_custom_call.1}
  #allocation0 [shape = 'u32[]', space=smem, size = 0x4, offset = 0x4, fixed_abs, tag = 'smem constant byte address 0x4 - core index']
  #allocation1 [shape = 'u32[144,128]{1,0:T(1,128)}', space=vmem, size = 0x12000, scoped, tag = 'internal scratch']
  #allocation2 [shape = 'f32[8,32]{1,0:T(8,128)}', space=vmem, size = 0x1000, scoped, tag = 'scratch operand']
  #allocation3 [shape = 'f32[8,4]{1,0:T(8,128)}', space=vmem, size = 0x1000, scoped, tag = 'scratch operand']
  #allocation4 [shape = 'f32[8,4]{1,0:T(8,128)}', space=vmem, size = 0x1000, scoped, tag = 'scratch operand']
  #allocation5 [shape = 'f32[8,32]{1,0:T(8,128)}', space=vmem, size = 0x1000, scoped, tag = 'scratch operand']
  %s0 = inlined_call_operand.hbm [shape: f32[2,8,32], index: 0, kind: input, shape index: {}]
  %s1 = inlined_call_operand.hbm [shape: f32[2,8,32], index: 1, kind: input, shape index: {}]
  %s2 = inlined_call_operand.hbm [shape: f32[2,8,32], index: 2, kind: input, shape index: {}]
  %s3 = inlined_call_operand.hbm [shape: f32[32,32], index: 3, kind: input, shape index: {}]
  %s4 = inlined_call_operand.hbm [shape: f32[32,32], index: 4, kind: input, shape index: {}]
  %s5 = inlined_call_operand.hbm [shape: f32[32,32], index: 5, kind: input, shape index: {}]
  %s6 = inlined_call_operand.vmem [shape: f32[1,32], index: 6, kind: input, shape index: {}]
  %s7 = inlined_call_operand.vmem [shape: f32[1,32], index: 7, kind: input, shape index: {}]
  %s8 = inlined_call_operand.hbm [shape: f32[1,32], index: 8, kind: input, shape index: {}]
  %s9 = inlined_call_operand.vmem [shape: f32[32,32], index: 9, kind: input, shape index: {}]
  %s10 = inlined_call_operand.vmem [shape: f32[1,32], index: 10, kind: input, shape index: {}]
  %s11 = inlined_call_operand.hbm [shape: f32[2,8,32], index: 11, kind: output, shape index: {}]
  %s12 = sld [smem:[#allocation0]]
  $region113: #{tpu_custom_call.1} parent=0
    _
  %s14 = ssub.s32 1, %s12
  %s15 = scalar_select 0, %s14, %s12
  $region1: #{tpu_custom_call.1} parent=0
    #allocation6 [shape = 'u8[8192]{0}', space=vmem, size = 0x2000, scoped, tag = 'input window, operand 0']
    #allocation7 [shape = 's32[2]{0}', space=sflag, size = 0x8, scoped, tag = 'scoped memory for tpu_custom_call.1']
    #allocation8 [shape = 's32[2]{0}', space=sflag, size = 0x8, scoped, tag = 'scoped memory for tpu_custom_call.1']
    #allocation9 [shape = 'u8[8192]{0}', space=vmem, size = 0x2000, scoped, tag = 'input window, operand 1']
    #allocation10 [shape = 's32[2]{0}', space=sflag, size = 0x8, scoped, tag = 'scoped memory for tpu_custom_call.1']
    #allocation11 [shape = 'u8[8192]{0}', space=vmem, size = 0x2000, scoped, tag = 'input window, operand 2']
    #allocation12 [shape = 'u8[16384]{0}', space=vmem, size = 0x4000, scoped, tag = 'input window, operand 3, single buffered']
    #allocation13 [shape = 's32[1]{0}', space=sflag, size = 0x4, scoped, tag = 'scoped memory for tpu_custom_call.1']
    #allocation14 [shape = 'u8[16384]{0}', space=vmem, size = 0x4000, scoped, tag = 'input window, operand 4, single buffered']
    #allocation15 [shape = 'u8[16384]{0}', space=vmem, size = 0x4000, scoped, tag = 'input window, operand 5, single buffered']
    #allocation16 [shape = 's32[1]{0}', space=sflag, size = 0x4, scoped, tag = 'scoped memory for tpu_custom_call.1']
    #allocation17 [shape = 'u8[512]{0}', space=vmem, size = 0x400, scoped, tag = 'input window, operand 8, single buffered']
    #allocation18 [shape = 'u8[8192]{0}', space=vmem, size = 0x2000, scoped, tag = 'output window, operand 0']
    %16 = vsyncpa [#allocation7], 0
    %s17 = scalar_lea.sflag [#allocation7], 1
    %18 = vsyncpa %s17, 0
    %19 = vsyncpa [#allocation10], 0
    %s20 = scalar_lea.sflag [#allocation10], 1
    %21 = vsyncpa %s20, 0
    %22 = vsyncpa [#allocation13], 0
    %23 = vsyncpa [#allocation16], 0
    %24 = vsyncpa [#allocation8], 0
    %s25 = scalar_lea.sflag [#allocation8], 1
    %26 = vsyncpa %s25, 0
    loop: start=0, step=1, limit=4
    $region2: #{tpu_custom_call.1} parent=1 // loop_pre_header
      _
    $region3: #{tpu_custom_call.1} parent=1 // loop_header
      %s28 = sphi 0, %s32
      %p29 = scmp.ge.s32.totalorder %s28, 4
      %s35 = sphi 0, %s54
      %s36 = sphi 0, %s50
      %s37 = sphi 0, %s46
      %s38 = sphi 0, %s35
      %s39 = sphi 0, %s36
      %s40 = sphi 0, %s37
      %s41 = sphi 0, %s38
      %s42 = sphi 0, %s39
      %s43 = sphi 0, %s40
      %s59 = sphi 0, %s61
      %s62 = sphi 0, %s59
      %s63 = sphi 0, %s62
      %s79 = sphi 0, %s63
      %s87 = sphi 0, %s89
      %s90 = sphi 0, %s87
      %s91 = sphi 0, %s90
      %s107 = sphi 0, %s91
      %s115 = sphi 0, %s117
      %s118 = sphi 0, %s115
      %s119 = sphi 0, %s118
      %s135 = sphi 0, %s119
      %s139 = sphi 0, %s139
      %s141 = sphi 0, %s139
      %s142 = sphi 0, %s141
      %s156 = sphi 0, %s142
      %s160 = sphi 0, %s160
      %s162 = sphi 0, %s160
      %s163 = sphi 0, %s162
      %s177 = sphi 0, %s163
      %s181 = sphi 0, %s181
      %s183 = sphi 0, %s181
      %s184 = sphi 0, %s183
      %s198 = sphi 0, %s184
      %s202 = sphi 0, %s202
      %s204 = sphi 0, %s202
      %s205 = sphi 0, %s204
      %s219 = sphi 0, %s205
      %s223 = sphi 0, %s223
      %s225 = sphi 0, %s223
      %s226 = sphi 0, %s225
      %s240 = sphi 0, %s226
      %s244 = sphi 0, %s244
      %s246 = sphi 0, %s244
      %s247 = sphi 0, %s246
      %s261 = sphi 0, %s247
      %s265 = sphi 0, %s265
      %s267 = sphi 0, %s265
      %s268 = sphi 0, %s267
      %s282 = sphi 0, %s268
      %s286 = sphi 0, %s286
      %s288 = sphi 0, %s286
      %s289 = sphi 0, %s288
      %s303 = sphi 0, %s289
      %s311 = sphi 0, %s313
      %s314 = sphi 0, %s311
      %s315 = sphi 0, %s314
      %s331 = sphi 0, %s315
    $region4: #{tpu_custom_call.1} parent=1 // loop_header_branch
      %31 = sbr.rel (%p29) target = $region8
    $region5: #{tpu_custom_call.1} parent=1 // loop_body
      %s33 = ssub.s32 %s28, 1
      %s34 = ssub.s32 %s28, 2
      %s44 = sadd.s32 1, %s37
      %p45 = scmp.ge.s32.totalorder %s44, 1
      %s46 = scalar_select %p45, 0, %s44
      %s47 = sadd.s32 1, %s36
      %s48 = scalar_select %p45, %s47, %s36
      %p49 = scmp.ge.s32.totalorder %s48, 1
      %s50 = scalar_select %p49, 0, %s48
      %s51 = sadd.s32 1, %s35
      %s52 = scalar_select %p49, %s51, %s35
      %p53 = scmp.ge.s32.totalorder %s52, 2
      %s54 = scalar_select %p53, 0, %s52
      %s55 = ssub.s32 %s35, %s54
      %s56 = ssub.s32 %s36, %s50
      %s57 = sor.u32 %s55, %s56
      %p58 = scmp.eq.s32.totalorder %s57, 0
      %s60 = sadd.s32 %s59, 1
      %s61 = scalar_select %p58, %s59, %s60
      %p64 = pneg %p58
      %p65 = scmp.eq.s32.totalorder %s28, 1
      %p66 = por %p64, %p65
      %p67 = scmp.ne.s32.totalorder %s59, %s62
      %p68 = scmp.eq.s32.totalorder %s28, 0
      %p69 = por %p67, %p68
      %p70 = scmp.ne.s32.totalorder %s59, %s62
      %p71 = scmp.eq.s32.totalorder %s33, 1
      %p72 = por %p70, %p71
      %p73 = scmp.ne.s32.totalorder %s62, %s63
      %p74 = scmp.eq.s32.totalorder %s33, 0
      %p75 = por %p73, %p74
      %p76 = scmp.ne.s32.totalorder %s62, %s63
      %p77 = scmp.eq.s32.totalorder %s34, 1
      %p78 = por %p76, %p77
      %p80 = scmp.ne.s32.totalorder %s63, %s79
      %p81 = scmp.eq.s32.totalorder %s34, 0
      %p82 = por %p80, %p81
      %s83 = ssub.s32 %s35, %s54
      %s84 = ssub.s32 %s37, %s46
      %s85 = sor.u32 %s83, %s84
      %p86 = scmp.eq.s32.totalorder %s85, 0
      %s88 = sadd.s32 %s87, 1
      %s89 = scalar_select %p86, %s87, %s88
      %p92 = pneg %p86
      %p93 = scmp.eq.s32.totalorder %s28, 1
      %p94 = por %p92, %p93
      %p95 = scmp.ne.s32.totalorder %s87, %s90
      %p96 = scmp.eq.s32.totalorder %s28, 0
      %p97 = por %p95, %p96
      %p98 = scmp.ne.s32.totalorder %s87, %s90
      %p99 = scmp.eq.s32.totalorder %s33, 1
      %p100 = por %p98, %p99
      %p101 = scmp.ne.s32.totalorder %s90, %s91
      %p102 = scmp.eq.s32.totalorder %s33, 0
      %p103 = por %p101, %p102
      %p104 = scmp.ne.s32.totalorder %s90, %s91
      %p105 = scmp.eq.s32.totalorder %s34, 1
      %p106 = por %p104, %p105
      %p108 = scmp.ne.s32.totalorder %s91, %s107
      %p109 = scmp.eq.s32.totalorder %s34, 0
      %p110 = por %p108, %p109
      %s111 = ssub.s32 %s35, %s54
      %s112 = ssub.s32 %s37, %s46
      %s113 = sor.u32 %s111, %s112
      %p114 = scmp.eq.s32.totalorder %s113, 0
      %s116 = sadd.s32 %s115, 1
      %s117 = scalar_select %p114, %s115, %s116
      %p120 = pneg %p114
      %p121 = scmp.eq.s32.totalorder %s28, 1
      %p122 = por %p120, %p121
      %p123 = scmp.ne.s32.totalorder %s115, %s118
      %p124 = scmp.eq.s32.totalorder %s28, 0
      %p125 = por %p123, %p124
      %p126 = scmp.ne.s32.totalorder %s115, %s118
      %p127 = scmp.eq.s32.totalorder %s33, 1
      %p128 = por %p126, %p127
      %p129 = scmp.ne.s32.totalorder %s118, %s119
      %p130 = scmp.eq.s32.totalorder %s33, 0
      %p131 = por %p129, %p130
      %p132 = scmp.ne.s32.totalorder %s118, %s119
      %p133 = scmp.eq.s32.totalorder %s34, 1
      %p134 = por %p132, %p133
      %p136 = scmp.ne.s32.totalorder %s119, %s135
      %p137 = scmp.eq.s32.totalorder %s34, 0
      %p138 = por %p136, %p137
      %s140 = sadd.s32 %s139, 1
      %p143 = scmp.eq.s32.totalorder %s28, 1
      %p144 = scmp.ne.s32.totalorder %s139, %s141
      %p145 = scmp.eq.s32.totalorder %s28, 0
      %p146 = por %p144, %p145
      %p147 = scmp.ne.s32.totalorder %s139, %s141
      %p148 = scmp.eq.s32.totalorder %s33, 1
      %p149 = por %p147, %p148
      %p150 = scmp.ne.s32.totalorder %s141, %s142
      %p151 = scmp.eq.s32.totalorder %s33, 0
      %p152 = por %p150, %p151
      %p153 = scmp.ne.s32.totalorder %s141, %s142
      %p154 = scmp.eq.s32.totalorder %s34, 1
      %p155 = por %p153, %p154
      %p157 = scmp.ne.s32.totalorder %s142, %s156
      %p158 = scmp.eq.s32.totalorder %s34, 0
      %p159 = por %p157, %p158
      %s161 = sadd.s32 %s160, 1
      %p164 = scmp.eq.s32.totalorder %s28, 1
      %p165 = scmp.ne.s32.totalorder %s160, %s162
      %p166 = scmp.eq.s32.totalorder %s28, 0
      %p167 = por %p165, %p166
      %p168 = scmp.ne.s32.totalorder %s160, %s162
      %p169 = scmp.eq.s32.totalorder %s33, 1
      %p170 = por %p168, %p169
      %p171 = scmp.ne.s32.totalorder %s162, %s163
      %p172 = scmp.eq.s32.totalorder %s33, 0
      %p173 = por %p171, %p172
      %p174 = scmp.ne.s32.totalorder %s162, %s163
      %p175 = scmp.eq.s32.totalorder %s34, 1
      %p176 = por %p174, %p175
      %p178 = scmp.ne.s32.totalorder %s163, %s177
      %p179 = scmp.eq.s32.totalorder %s34, 0
      %p180 = por %p178, %p179
      %s182 = sadd.s32 %s181, 1
      %p185 = scmp.eq.s32.totalorder %s28, 1
      %p186 = scmp.ne.s32.totalorder %s181, %s183
      %p187 = scmp.eq.s32.totalorder %s28, 0
      %p188 = por %p186, %p187
      %p189 = scmp.ne.s32.totalorder %s181, %s183
      %p190 = scmp.eq.s32.totalorder %s33, 1
      %p191 = por %p189, %p190
      %p192 = scmp.ne.s32.totalorder %s183, %s184
      %p193 = scmp.eq.s32.totalorder %s33, 0
      %p194 = por %p192, %p193
      %p195 = scmp.ne.s32.totalorder %s183, %s184
      %p196 = scmp.eq.s32.totalorder %s34, 1
      %p197 = por %p195, %p196
      %p199 = scmp.ne.s32.totalorder %s184, %s198
      %p200 = scmp.eq.s32.totalorder %s34, 0
      %p201 = por %p199, %p200
      %s203 = sadd.s32 %s202, 1
      %p206 = scmp.eq.s32.totalorder %s28, 1
      %p207 = scmp.ne.s32.totalorder %s202, %s204
      %p208 = scmp.eq.s32.totalorder %s28, 0
      %p209 = por %p207, %p208
      %p210 = scmp.ne.s32.totalorder %s202, %s204
      %p211 = scmp.eq.s32.totalorder %s33, 1
      %p212 = por %p210, %p211
      %p213 = scmp.ne.s32.totalorder %s204, %s205
      %p214 = scmp.eq.s32.totalorder %s33, 0
      %p215 = por %p213, %p214
      %p216 = scmp.ne.s32.totalorder %s204, %s205
      %p217 = scmp.eq.s32.totalorder %s34, 1
      %p218 = por %p216, %p217
      %p220 = scmp.ne.s32.totalorder %s205, %s219
      %p221 = scmp.eq.s32.totalorder %s34, 0
      %p222 = por %p220, %p221
      %s224 = sadd.s32 %s223, 1
      %p227 = scmp.eq.s32.totalorder %s28, 1
      %p228 = scmp.ne.s32.totalorder %s223, %s225
      %p229 = scmp.eq.s32.totalorder %s28, 0
      %p230 = por %p228, %p229
      %p231 = scmp.ne.s32.totalorder %s223, %s225
      %p232 = scmp.eq.s32.totalorder %s33, 1
      %p233 = por %p231, %p232
      %p234 = scmp.ne.s32.totalorder %s225, %s226
      %p235 = scmp.eq.s32.totalorder %s33, 0
      %p236 = por %p234, %p235
      %p237 = scmp.ne.s32.totalorder %s225, %s226
      %p238 = scmp.eq.s32.totalorder %s34, 1
      %p239 = por %p237, %p238
      %p241 = scmp.ne.s32.totalorder %s226, %s240
      %p242 = scmp.eq.s32.totalorder %s34, 0
      %p243 = por %p241, %p242
      %s245 = sadd.s32 %s244, 1
      %p248 = scmp.eq.s32.totalorder %s28, 1
      %p249 = scmp.ne.s32.totalorder %s244, %s246
      %p250 = scmp.eq.s32.totalorder %s28, 0
      %p251 = por %p249, %p250
      %p252 = scmp.ne.s32.totalorder %s244, %s246
      %p253 = scmp.eq.s32.totalorder %s33, 1
      %p254 = por %p252, %p253
      %p255 = scmp.ne.s32.totalorder %s246, %s247
      %p256 = scmp.eq.s32.totalorder %s33, 0
      %p257 = por %p255, %p256
      %p258 = scmp.ne.s32.totalorder %s246, %s247
      %p259 = scmp.eq.s32.totalorder %s34, 1
      %p260 = por %p258, %p259
      %p262 = scmp.ne.s32.totalorder %s247, %s261
      %p263 = scmp.eq.s32.totalorder %s34, 0
      %p264 = por %p262, %p263
      %s266 = sadd.s32 %s265, 1
      %p269 = scmp.eq.s32.totalorder %s28, 1
      %p270 = scmp.ne.s32.totalorder %s265, %s267
      %p271 = scmp.eq.s32.totalorder %s28, 0
      %p272 = por %p270, %p271
      %p273 = scmp.ne.s32.totalorder %s265, %s267
      %p274 = scmp.eq.s32.totalorder %s33, 1
      %p275 = por %p273, %p274
      %p276 = scmp.ne.s32.totalorder %s267, %s268
      %p277 = scmp.eq.s32.totalorder %s33, 0
      %p278 = por %p276, %p277
      %p279 = scmp.ne.s32.totalorder %s267, %s268
      %p280 = scmp.eq.s32.totalorder %s34, 1
      %p281 = por %p279, %p280
      %p283 = scmp.ne.s32.totalorder %s268, %s282
      %p284 = scmp.eq.s32.totalorder %s34, 0
      %p285 = por %p283, %p284
      %s287 = sadd.s32 %s286, 1
      %p290 = scmp.eq.s32.totalorder %s28, 1
      %p291 = scmp.ne.s32.totalorder %s286, %s288
      %p292 = scmp.eq.s32.totalorder %s28, 0
      %p293 = por %p291, %p292
      %p294 = scmp.ne.s32.totalorder %s286, %s288
      %p295 = scmp.eq.s32.totalorder %s33, 1
      %p296 = por %p294, %p295
      %p297 = scmp.ne.s32.totalorder %s288, %s289
      %p298 = scmp.eq.s32.totalorder %s33, 0
      %p299 = por %p297, %p298
      %p300 = scmp.ne.s32.totalorder %s288, %s289
      %p301 = scmp.eq.s32.totalorder %s34, 1
      %p302 = por %p300, %p301
      %p304 = scmp.ne.s32.totalorder %s289, %s303
      %p305 = scmp.eq.s32.totalorder %s34, 0
      %p306 = por %p304, %p305
      %s307 = ssub.s32 %s35, %s54
      %s308 = ssub.s32 %s36, %s50
      %s309 = sor.u32 %s307, %s308
      %p310 = scmp.eq.s32.totalorder %s309, 0
      %s312 = sadd.s32 %s311, 1
      %s313 = scalar_select %p310, %s311, %s312
      %p316 = pneg %p310
      %p317 = scmp.eq.s32.totalorder %s28, 1
      %p318 = por %p316, %p317
      %p319 = scmp.ne.s32.totalorder %s311, %s314
      %p320 = scmp.eq.s32.totalorder %s28, 0
      %p321 = por %p319, %p320
      %p322 = scmp.ne.s32.totalorder %s311, %s314
      %p323 = scmp.eq.s32.totalorder %s33, 1
      %p324 = por %p322, %p323
      %p325 = scmp.ne.s32.totalorder %s314, %s315
      %p326 = scmp.eq.s32.totalorder %s33, 0
      %p327 = por %p325, %p326
      %p328 = scmp.ne.s32.totalorder %s314, %s315
      %p329 = scmp.eq.s32.totalorder %s34, 1
      %p330 = por %p328, %p329
      %p332 = scmp.ne.s32.totalorder %s315, %s331
      %p333 = scmp.eq.s32.totalorder %s34, 0
      %p334 = por %p332, %p333
      %p335 = scmp.le.s32.totalorder 1, %s28
      %p336 = scmp.lt.s32.totalorder %s28, 3
      %p337 = pnand %p335, %p336
      %p338 = pneg %p337
      // Predicated region
      $region9: #{tpu_custom_call.1} parent=5 // pred_check
        _
      $region10: #{tpu_custom_call.1} parent=5 // pred_check_branch
        %340 = sbr.rel (%p337) target = $region12
      $region11: #{tpu_custom_call.1} parent=5 // pred_region
        %s341 = ssub.s32 %s28, 1
        // Predicated region
        $region13: #{tpu_custom_call.1} parent=11 // pred_check
          %p342 = pneg %p152
        $region14: #{tpu_custom_call.1} parent=11 // pred_check_branch
          %344 = sbr.rel (%p342) target = $region16
        $region15: #{tpu_custom_call.1} parent=11 // pred_region
          %s346 = ssub.s32 512, 512
          %347 = vsyncadd [#allocation13], %s346
          %s348 = sshll.u32 [#allocation12], 4
          %s349 = int_to_ptr.vmem [resolvable:$true] %s348
          %354 = dma.hbm_to_vmem [thread:$0]  %s3, 512, %s349, [#allocation13], 128, 128, 8
        $region16: #{tpu_custom_call.1} parent=11 // pred_fallthru
          _
        // Predicated region
        $region17: #{tpu_custom_call.1} parent=11 // pred_check
          %p355 = pneg %p173
        $region18: #{tpu_custom_call.1} parent=11 // pred_check_branch
          %357 = sbr.rel (%p355) target = $region20
        $region19: #{tpu_custom_call.1} parent=11 // pred_region
          %s359 = ssub.s32 512, 512
          %360 = vsyncadd [#allocation13], %s359
          %s361 = sshll.u32 [#allocation14], 4
          %s362 = int_to_ptr.vmem [resolvable:$true] %s361
          %367 = dma.hbm_to_vmem [thread:$0]  %s4, 512, %s362, [#allocation13], 128, 128, 8
        $region20: #{tpu_custom_call.1} parent=11 // pred_fallthru
          _
        // Predicated region
        $region21: #{tpu_custom_call.1} parent=11 // pred_check
          %p368 = pneg %p194
        $region22: #{tpu_custom_call.1} parent=11 // pred_check_branch
          %370 = sbr.rel (%p368) target = $region24
        $region23: #{tpu_custom_call.1} parent=11 // pred_region
          %s372 = ssub.s32 512, 512
          %373 = vsyncadd [#allocation16], %s372
          %s374 = sshll.u32 [#allocation15], 4
          %s375 = int_to_ptr.vmem [resolvable:$true] %s374
          %380 = dma.hbm_to_vmem [thread:$0]  %s5, 512, %s375, [#allocation16], 128, 128, 8
        $region24: #{tpu_custom_call.1} parent=11 // pred_fallthru
          _
        // Predicated region
        $region25: #{tpu_custom_call.1} parent=11 // pred_check
          %p381 = pneg %p215
        $region26: #{tpu_custom_call.1} parent=11 // pred_check_branch
          %383 = sbr.rel (%p381) target = $region28
        $region27: #{tpu_custom_call.1} parent=11 // pred_region
          _
        $region28: #{tpu_custom_call.1} parent=11 // pred_fallthru
          _
        // Predicated region
        $region29: #{tpu_custom_call.1} parent=11 // pred_check
          %p384 = pneg %p236
        $region30: #{tpu_custom_call.1} parent=11 // pred_check_branch
          %386 = sbr.rel (%p384) target = $region32
        $region31: #{tpu_custom_call.1} parent=11 // pred_region
          _
        $region32: #{tpu_custom_call.1} parent=11 // pred_fallthru
          _
        // Predicated region
        $region33: #{tpu_custom_call.1} parent=11 // pred_check
          %p387 = pneg %p257
        $region34: #{tpu_custom_call.1} parent=11 // pred_check_branch
          %389 = sbr.rel (%p387) target = $region36
        $region35: #{tpu_custom_call.1} parent=11 // pred_region
          %s391 = ssub.s32 16, 16
          %392 = vsyncadd [#allocation16], %s391
          %s394 = sshll.u32 [#allocation17], 4
          %s395 = int_to_ptr.vmem [resolvable:$true] %s394
          %397 = dma.hbm_to_vmem [thread:$0]  %s8, 16, %s395, [#allocation16]
        $region36: #{tpu_custom_call.1} parent=11 // pred_fallthru
          _
        // Predicated region
        $region37: #{tpu_custom_call.1} parent=11 // pred_check
          %p398 = pneg %p278
        $region38: #{tpu_custom_call.1} parent=11 // pred_check_branch
          %400 = sbr.rel (%p398) target = $region40
        $region39: #{tpu_custom_call.1} parent=11 // pred_region
          _
        $region40: #{tpu_custom_call.1} parent=11 // pred_fallthru
          _
        // Predicated region
        $region41: #{tpu_custom_call.1} parent=11 // pred_check
          %p401 = pneg %p299
        $region42: #{tpu_custom_call.1} parent=11 // pred_check_branch
          %403 = sbr.rel (%p401) target = $region44
        $region43: #{tpu_custom_call.1} parent=11 // pred_region
          _
        $region44: #{tpu_custom_call.1} parent=11 // pred_fallthru
          _
      $region12: #{tpu_custom_call.1} parent=5 // pred_fallthru
        _
      %p404 = scmp.lt.s32.totalorder %s28, 2
      // Predicated region
      $region45: #{tpu_custom_call.1} parent=5 // pred_check
        %p405 = pneg %p404
      $region46: #{tpu_custom_call.1} parent=5 // pred_check_branch
        %407 = sbr.rel (%p405) target = $region48
      $region47: #{tpu_custom_call.1} parent=5 // pred_region
        // Predicated region
        $region49: #{tpu_custom_call.1} parent=47 // pred_check
          %p408 = pneg %p69
        $region50: #{tpu_custom_call.1} parent=47 // pred_check_branch
          %410 = sbr.rel (%p408) target = $region52
        $region51: #{tpu_custom_call.1} parent=47 // pred_region
          %s411 = sand.u32 %s59, 1
          %s412 = scalar_lea.sflag [#allocation7], %s411
          %s413 = sand.u32 %s59, 1
          %s414 = smul.addr %s413, 8
          %s415 = scalar_lea.vmem [#allocation6], %s414
          %s417 = ssub.s32 128, 128
          %418 = vsyncadd %s412, %s417
          %s419 = sadd.s32 %s36, %s35
          %s420 = smul.addr %s419, 128
          %s421 = scalar_lea.hbm %s0, %s420
          %s423 = sshll.u32 %s415, 4
          %s424 = int_to_ptr.vmem [resolvable:$true] %s423
          %426 = dma.hbm_to_vmem [thread:$0]  %s421, 128, %s424, %s412
        $region52: #{tpu_custom_call.1} parent=47 // pred_fallthru
          _
        // Predicated region
        $region53: #{tpu_custom_call.1} parent=47 // pred_check
          %p427 = pneg %p97
        $region54: #{tpu_custom_call.1} parent=47 // pred_check_branch
          %429 = sbr.rel (%p427) target = $region56
        $region55: #{tpu_custom_call.1} parent=47 // pred_region
          %s430 = sand.u32 %s28, 1
          %s431 = scalar_lea.sflag [#allocation10], %s430
          %s432 = sand.u32 %s87, 1
          %s433 = smul.addr %s432, 8
          %s434 = scalar_lea.vmem [#allocation9], %s433
          %s436 = ssub.s32 128, 128
          %437 = vsyncadd %s431, %s436
          %s438 = sadd.s32 %s37, %s35
          %s439 = smul.addr %s438, 128
          %s440 = scalar_lea.hbm %s1, %s439
          %s442 = sshll.u32 %s434, 4
          %s443 = int_to_ptr.vmem [resolvable:$true] %s442
          %445 = dma.hbm_to_vmem [thread:$0]  %s440, 128, %s443, %s431
        $region56: #{tpu_custom_call.1} parent=47 // pred_fallthru
          _
        // Predicated region
        $region57: #{tpu_custom_call.1} parent=47 // pred_check
          %p446 = pneg %p125
        $region58: #{tpu_custom_call.1} parent=47 // pred_check_branch
          %448 = sbr.rel (%p446) target = $region60
        $region59: #{tpu_custom_call.1} parent=47 // pred_region
          %s449 = sand.u32 %s28, 1
          %s450 = scalar_lea.sflag [#allocation10], %s449
          %s451 = sand.u32 %s115, 1
          %s452 = smul.addr %s451, 8
          %s453 = scalar_lea.vmem [#allocation11], %s452
          %s455 = ssub.s32 128, 128
          %456 = vsyncadd %s450, %s455
          %s457 = sadd.s32 %s37, %s35
          %s458 = smul.addr %s457, 128
          %s459 = scalar_lea.hbm %s2, %s458
          %s461 = sshll.u32 %s453, 4
          %s462 = int_to_ptr.vmem [resolvable:$true] %s461
          %464 = dma.hbm_to_vmem [thread:$0]  %s459, 128, %s462, %s450
        $region60: #{tpu_custom_call.1} parent=47 // pred_fallthru
          _
      $region48: #{tpu_custom_call.1} parent=5 // pred_fallthru
        _
      %p465 = scmp.le.s32.totalorder 1, %s28
      %p466 = scmp.lt.s32.totalorder %s28, 3
      %p467 = pnand %p465, %p466
      %p468 = pneg %p467
      // Predicated region
      $region61: #{tpu_custom_call.1} parent=5 // pred_check
        _
      $region62: #{tpu_custom_call.1} parent=5 // pred_check_branch
        %470 = sbr.rel (%p467) target = $region64
      $region63: #{tpu_custom_call.1} parent=5 // pred_region
        %s471 = ssub.s32 %s28, 1
        %s472 = sand.u32 %s62, 1
        %s473 = scalar_lea.sflag [#allocation7], %s472
        %s474 = sand.u32 %s62, 1
        %s475 = smul.addr %s474, 8
        %s476 = scalar_lea.vmem [#allocation6], %s475
        // Predicated region
        $region65: #{tpu_custom_call.1} parent=63 // pred_check
          %p477 = pneg %p75
        $region66: #{tpu_custom_call.1} parent=63 // pred_check_branch
          %479 = sbr.rel (%p477) target = $region68
        $region67: #{tpu_custom_call.1} parent=63 // pred_region
          %480 = dma.done %s473, 128
        $region68: #{tpu_custom_call.1} parent=63 // pred_fallthru
          _
        %s481 = sand.u32 %s33, 1
        %s482 = scalar_lea.sflag [#allocation10], %s481
        %s483 = sand.u32 %s90, 1
        %s484 = smul.addr %s483, 8
        %s485 = scalar_lea.vmem [#allocation9], %s484
        // Predicated region
        $region69: #{tpu_custom_call.1} parent=63 // pred_check
          %p486 = pneg %p103
        $region70: #{tpu_custom_call.1} parent=63 // pred_check_branch
          %488 = sbr.rel (%p486) target = $region72
        $region71: #{tpu_custom_call.1} parent=63 // pred_region
          %489 = dma.done %s482, 128
        $region72: #{tpu_custom_call.1} parent=63 // pred_fallthru
          _
        %s490 = sand.u32 %s33, 1
        %s491 = scalar_lea.sflag [#allocation10], %s490
        %s492 = sand.u32 %s118, 1
        %s493 = smul.addr %s492, 8
        %s494 = scalar_lea.vmem [#allocation11], %s493
        // Predicated region
        $region73: #{tpu_custom_call.1} parent=63 // pred_check
          %p495 = pneg %p131
        $region74: #{tpu_custom_call.1} parent=63 // pred_check_branch
          %497 = sbr.rel (%p495) target = $region76
        $region75: #{tpu_custom_call.1} parent=63 // pred_region
          %498 = dma.done %s491, 128
        $region76: #{tpu_custom_call.1} parent=63 // pred_fallthru
          _
        // Predicated region
        $region77: #{tpu_custom_call.1} parent=63 // pred_check
          %p499 = pneg %p152
        $region78: #{tpu_custom_call.1} parent=63 // pred_check_branch
          %501 = sbr.rel (%p499) target = $region80
        $region79: #{tpu_custom_call.1} parent=63 // pred_region
          %502 = dma.done [#allocation13], 512
        $region80: #{tpu_custom_call.1} parent=63 // pred_fallthru
          _
        // Predicated region
        $region81: #{tpu_custom_call.1} parent=63 // pred_check
          %p503 = pneg %p173
        $region82: #{tpu_custom_call.1} parent=63 // pred_check_branch
          %505 = sbr.rel (%p503) target = $region84
        $region83: #{tpu_custom_call.1} parent=63 // pred_region
          %506 = dma.done [#allocation13], 512
        $region84: #{tpu_custom_call.1} parent=63 // pred_fallthru
          _
        // Predicated region
        $region85: #{tpu_custom_call.1} parent=63 // pred_check
          %p507 = pneg %p194
        $region86: #{tpu_custom_call.1} parent=63 // pred_check_branch
          %509 = sbr.rel (%p507) target = $region88
        $region87: #{tpu_custom_call.1} parent=63 // pred_region
          %510 = dma.done [#allocation16], 512
        $region88: #{tpu_custom_call.1} parent=63 // pred_fallthru
          _
        // Predicated region
        $region89: #{tpu_custom_call.1} parent=63 // pred_check
          %p511 = pneg %p257
        $region90: #{tpu_custom_call.1} parent=63 // pred_check_branch
          %513 = sbr.rel (%p511) target = $region92
        $region91: #{tpu_custom_call.1} parent=63 // pred_region
          %514 = dma.done [#allocation16], 16
        $region92: #{tpu_custom_call.1} parent=63 // pred_fallthru
          _
        %s515 = sand.u32 %s62, 1
        %s516 = scalar_lea.sflag [#allocation7], %s515
        %s517 = sand.u32 %s62, 1
        %s518 = smul.addr %s517, 8
        %s519 = scalar_lea.vmem [#allocation6], %s518
        %p520 = pneg %p75
        %p521 = pneg %p72
        %s522 = sand.u32 %s33, 1
        %s523 = scalar_lea.sflag [#allocation10], %s522
        %s524 = sand.u32 %s90, 1
        %s525 = smul.addr %s524, 8
        %s526 = scalar_lea.vmem [#allocation9], %s525
        %p527 = pneg %p103
        %p528 = pneg %p100
        %s529 = sand.u32 %s33, 1
        %s530 = scalar_lea.sflag [#allocation10], %s529
        %s531 = sand.u32 %s118, 1
        %s532 = smul.addr %s531, 8
        %s533 = scalar_lea.vmem [#allocation11], %s532
        %p534 = pneg %p131
        %p535 = pneg %p128
        %p536 = pneg %p152
        %p537 = pneg %p149
        %p538 = pneg %p173
        %p539 = pneg %p170
        %p540 = pneg %p194
        %p541 = pneg %p191
        %p542 = pneg %p215
        %p543 = pneg %p212
        %p544 = pneg %p236
        %p545 = pneg %p233
        %p546 = pneg %p257
        %p547 = pneg %p254
        %p548 = pneg %p278
        %p549 = pneg %p275
        %p550 = pneg %p299
        %p551 = pneg %p296
        %p552 = pneg %p327
        %p553 = pneg %p324
        %s554 = sand.u32 %s314, 1
        %s555 = scalar_lea.sflag [#allocation8], %s554
        %s556 = sand.u32 %s314, 1
        %s557 = smul.addr %s556, 8
        %s558 = scalar_lea.vmem [#allocation18], %s557
        %p559 = scmp.eq.s32.totalorder %s40, 0
        // Predicated region
        $region93: #{tpu_custom_call.1} parent=63 // pred_check
          %p560 = pneg %p559
        $region94: #{tpu_custom_call.1} parent=63 // pred_check_branch
          %562 = sbr.rel (%p560) target = $region96
        $region95: #{tpu_custom_call.1} parent=63 // pred_region
          %v563 = vld [vmem:[%s476] sm:$0xff]
          %v564 = vld [vmem:[#allocation12] sm:$0xff]
          %v565 = vld [vmem:[#allocation12 + $0x8] sm:$0xff]
          %v566 = vld [vmem:[#allocation12 + $0x10] sm:$0xff]
          %v567 = vld [vmem:[#allocation12 + $0x18] sm:$0xff]
          %v568 = vld [vmem:[%s6] sm:$0x1]
          %v570 = vlaneseq
          %v571 = vshrl.u32 %v570, 7
          %v572 = vsub.s32 0, %v571
          %v573 = vrot.slane %v568, %v572
          %vm575 = vcmask 261120
          %v577 = vsel %vm575, %v563, 0
          %579 = vmatprep.subr.mxu0 0.0
          %580 = vmatpush1.msra.mxu0 %v564
          %581 = vmatprep.subr.mxu0 0.0
          %582 = vmatpush1.msra.mxu0 %v565
          %583 = vmatprep.subr.mxu0 0.0
          %584 = vmatpush1.msra.mxu0 %v566
          %585 = vmatprep.subr.mxu0 0.0
          %586 = vmatpush1.msra.mxu0 %v567
          %587 = vmatprep.subr.mxu0 0.0
          %588 = vmatpush1.msra.mxu0 0.0
          %589 = vmatprep.subr.mxu0 0.0
          %590 = vmatpush1.msra.mxu0 0.0
          %591 = vmatprep.subr.mxu0 0.0
          %592 = vmatpush1.msra.mxu0 0.0
          %593 = vmatprep.subr.mxu0 0.0
          %594 = vmatpush1.msra.mxu0 0.0
          %595 = vmatprep.subr.mxu0 0.0
          %596 = vmatpush1.msra.mxu0 0.0
          %597 = vmatprep.subr.mxu0 0.0
          %598 = vmatpush1.msra.mxu0 0.0
          %599 = vmatprep.subr.mxu0 0.0
          %600 = vmatpush1.msra.mxu0 0.0
          %601 = vmatprep.subr.mxu0 0.0
          %602 = vmatpush1.msra.mxu0 0.0
          %603 = vmatprep.subr.mxu0 0.0
          %604 = vmatpush1.msra.mxu0 0.0
          %605 = vmatprep.subr.mxu0 0.0
          %606 = vmatpush1.msra.mxu0 0.0
          %607 = vmatprep.subr.mxu0 0.0
          %608 = vmatpush1.msra.mxu0 0.0
          %609 = vmatprep.subr.mxu0 0.0
          %610 = vmatpush1.msra.mxu0 0.0
          %611 = vmatprep.subr.mxu0 0.0
          %612 = vmatpush1.msra.mxu0 0.0
          %613 = vmatprep.subr.mxu0 0.0
          %614 = vmatpush1.msra.mxu0 0.0
          %615 = vmatprep.subr.mxu0 0.0
          %616 = vmatpush1.msra.mxu0 0.0
          %617 = vmatprep.subr.mxu0 0.0
          %618 = vmatpush1.msra.mxu0 0.0
          %619 = vmatprep.subr.mxu0 0.0
          %620 = vmatpush1.msra.mxu0 0.0
          %621 = vmatprep.subr.mxu0 0.0
          %622 = vmatpush1.msra.mxu0 0.0
          %623 = vmatprep.subr.mxu0 0.0
          %624 = vmatpush1.msra.mxu0 0.0
          %625 = vmatprep.subr.mxu0 0.0
          %626 = vmatpush1.msra.mxu0 0.0
          %627 = vmatprep.subr.mxu0 0.0
          %628 = vmatpush1.msra.mxu0 0.0
          %629 = vmatprep.subr.mxu0 0.0
          %630 = vmatpush1.msra.mxu0 0.0
          %631 = vmatprep.subr.mxu0 0.0
          %632 = vmatpush1.msra.mxu0 0.0
          %633 = vmatprep.subr.mxu0 0.0
          %634 = vmatpush1.msra.mxu0 0.0
          %635 = vmatprep.subr.mxu0 0.0
          %636 = vmatpush1.msra.mxu0 0.0
          %637 = vmatprep.subr.mxu0 0.0
          %638 = vmatpush1.msra.mxu0 0.0
          %639 = vmatprep.subr.mxu0 0.0
          %640 = vmatpush1.msra.mxu0 0.0
          %641 = vmatprep.subr.mxu0 0.0
          %642 = vmatpush1.msra.mxu0 0.0
          %643 = vmatprep.mubr.f32.mxu0 0.0
          %644 = vmatmul.mubr.f32.gmra.mrb[0].mxu0 %v577
          %v645 = vpop.f32.mrb[0].mxu0
          %v646 = vadd.f32 %v573, %v645
          %v647 = vpop.f32.mrb[0].mxu0
          %648 = vdwg.mxu0
          %v649 = vmul.f32 %v646, 0.35355338
          %650 = vst.msk [vmem:[#allocation2] sm:$0xff] %vm575, %v649
          %vm651 = vcmask 31744
          %652 = vst.msk [vmem:[#allocation3] sm:$0xff] %vm651, -inf
          %653 = vst.msk [vmem:[#allocation4] sm:$0xff] %vm651, 0.0
          %654 = vst.msk [vmem:[#allocation5] sm:$0xff] %vm575, 0.0
        $region96: #{tpu_custom_call.1} parent=63 // pred_fallthru
          _
        %v655 = vld [vmem:[%s485] sm:$0xff]
        %v656 = vld [vmem:[%s494] sm:$0xff]
        %v657 = vld [vmem:[#allocation14] sm:$0xff]
        %v658 = vld [vmem:[#allocation14 + $0x8] sm:$0xff]
        %v659 = vld [vmem:[#allocation14 + $0x10] sm:$0xff]
        %v660 = vld [vmem:[#allocation14 + $0x18] sm:$0xff]
        %v661 = vld [vmem:[%s7] sm:$0x1]
        %v663 = vlaneseq
        %v664 = vshrl.u32 %v663, 7
        %v665 = vsub.s32 0, %v664
        %v666 = vrot.slane %v661, %v665
        %vm668 = vcmask 261120
        %v670 = vsel %vm668, %v655, 0
        %672 = vmatprep.subr.mxu0 0.0
        %673 = vmatpush1.msra.mxu0 %v657
        %674 = vmatprep.subr.mxu0 0.0
        %675 = vmatpush1.msra.mxu0 %v658
        %676 = vmatprep.subr.mxu0 0.0
        %677 = vmatpush1.msra.mxu0 %v659
        %678 = vmatprep.subr.mxu0 0.0
        %679 = vmatpush1.msra.mxu0 %v660
        %680 = vmatprep.subr.mxu0 0.0
        %681 = vmatpush1.msra.mxu0 0.0
        %682 = vmatprep.subr.mxu0 0.0
        %683 = vmatpush1.msra.mxu0 0.0
        %684 = vmatprep.subr.mxu0 0.0
        %685 = vmatpush1.msra.mxu0 0.0
        %686 = vmatprep.subr.mxu0 0.0
        %687 = vmatpush1.msra.mxu0 0.0
        %688 = vmatprep.subr.mxu0 0.0
        %689 = vmatpush1.msra.mxu0 0.0
        %690 = vmatprep.subr.mxu0 0.0
        %691 = vmatpush1.msra.mxu0 0.0
        %692 = vmatprep.subr.mxu0 0.0
        %693 = vmatpush1.msra.mxu0 0.0
        %694 = vmatprep.subr.mxu0 0.0
        %695 = vmatpush1.msra.mxu0 0.0
        %696 = vmatprep.subr.mxu0 0.0
        %697 = vmatpush1.msra.mxu0 0.0
        %698 = vmatprep.subr.mxu0 0.0
        %699 = vmatpush1.msra.mxu0 0.0
        %700 = vmatprep.subr.mxu0 0.0
        %701 = vmatpush1.msra.mxu0 0.0
        %702 = vmatprep.subr.mxu0 0.0
        %703 = vmatpush1.msra.mxu0 0.0
        %704 = vmatprep.subr.mxu0 0.0
        %705 = vmatpush1.msra.mxu0 0.0
        %706 = vmatprep.subr.mxu0 0.0
        %707 = vmatpush1.msra.mxu0 0.0
        %708 = vmatprep.subr.mxu0 0.0
        %709 = vmatpush1.msra.mxu0 0.0
        %710 = vmatprep.subr.mxu0 0.0
        %711 = vmatpush1.msra.mxu0 0.0
        %712 = vmatprep.subr.mxu0 0.0
        %713 = vmatpush1.msra.mxu0 0.0
        %714 = vmatprep.subr.mxu0 0.0
        %715 = vmatpush1.msra.mxu0 0.0
        %716 = vmatprep.subr.mxu0 0.0
        %717 = vmatpush1.msra.mxu0 0.0
        %718 = vmatprep.subr.mxu0 0.0
        %719 = vmatpush1.msra.mxu0 0.0
        %720 = vmatprep.subr.mxu0 0.0
        %721 = vmatpush1.msra.mxu0 0.0
        %722 = vmatprep.subr.mxu0 0.0
        %723 = vmatpush1.msra.mxu0 0.0
        %724 = vmatprep.subr.mxu0 0.0
        %725 = vmatpush1.msra.mxu0 0.0
        %726 = vmatprep.subr.mxu0 0.0
        %727 = vmatpush1.msra.mxu0 0.0
        %728 = vmatprep.subr.mxu0 0.0
        %729 = vmatpush1.msra.mxu0 0.0
        %730 = vmatprep.subr.mxu0 0.0
        %731 = vmatpush1.msra.mxu0 0.0
        %732 = vmatprep.subr.mxu0 0.0
        %733 = vmatpush1.msra.mxu0 0.0
        %734 = vmatprep.subr.mxu0 0.0
        %735 = vmatpush1.msra.mxu0 0.0
        %736 = vmatprep.mubr.f32.mxu0 0.0
        %737 = vmatmul.mubr.f32.gmra.mrb[0].mxu0 %v670
        %v738 = vpop.f32.mrb[0].mxu0
        %v739 = vadd.f32 %v666, %v738
        %v740 = vpop.f32.mrb[0].mxu0
        %741 = vdwg.mxu0
        %v742 = vld [vmem:[#allocation15] sm:$0xff]
        %v743 = vld [vmem:[#allocation15 + $0x8] sm:$0xff]
        %v744 = vld [vmem:[#allocation15 + $0x10] sm:$0xff]
        %v745 = vld [vmem:[#allocation15 + $0x18] sm:$0xff]
        %v746 = vld [vmem:[#allocation17] sm:$0x1]
        %v748 = vlaneseq
        %v749 = vshrl.u32 %v748, 7
        %v750 = vsub.s32 0, %v749
        %v751 = vrot.slane %v746, %v750
        %v754 = vsel %vm668, %v656, 0
        %756 = vmatprep.subr.mxu0 0.0
        %757 = vmatpush1.msra.mxu0 %v742
        %758 = vmatprep.subr.mxu0 0.0
        %759 = vmatpush1.msra.mxu0 %v743
        %760 = vmatprep.subr.mxu0 0.0
        %761 = vmatpush1.msra.mxu0 %v744
        %762 = vmatprep.subr.mxu0 0.0
        %763 = vmatpush1.msra.mxu0 %v745
        %764 = vmatprep.subr.mxu0 0.0
        %765 = vmatpush1.msra.mxu0 0.0
        %766 = vmatprep.subr.mxu0 0.0
        %767 = vmatpush1.msra.mxu0 0.0
        %768 = vmatprep.subr.mxu0 0.0
        %769 = vmatpush1.msra.mxu0 0.0
        %770 = vmatprep.subr.mxu0 0.0
        %771 = vmatpush1.msra.mxu0 0.0
        %772 = vmatprep.subr.mxu0 0.0
        %773 = vmatpush1.msra.mxu0 0.0
        %774 = vmatprep.subr.mxu0 0.0
        %775 = vmatpush1.msra.mxu0 0.0
        %776 = vmatprep.subr.mxu0 0.0
        %777 = vmatpush1.msra.mxu0 0.0
        %778 = vmatprep.subr.mxu0 0.0
        %779 = vmatpush1.msra.mxu0 0.0
        %780 = vmatprep.subr.mxu0 0.0
        %781 = vmatpush1.msra.mxu0 0.0
        %782 = vmatprep.subr.mxu0 0.0
        %783 = vmatpush1.msra.mxu0 0.0
        %784 = vmatprep.subr.mxu0 0.0
        %785 = vmatpush1.msra.mxu0 0.0
        %786 = vmatprep.subr.mxu0 0.0
        %787 = vmatpush1.msra.mxu0 0.0
        %788 = vmatprep.subr.mxu0 0.0
        %789 = vmatpush1.msra.mxu0 0.0
        %790 = vmatprep.subr.mxu0 0.0
        %791 = vmatpush1.msra.mxu0 0.0
        %792 = vmatprep.subr.mxu0 0.0
        %793 = vmatpush1.msra.mxu0 0.0
        %794 = vmatprep.subr.mxu0 0.0
        %795 = vmatpush1.msra.mxu0 0.0
        %796 = vmatprep.subr.mxu0 0.0
        %797 = vmatpush1.msra.mxu0 0.0
        %798 = vmatprep.subr.mxu0 0.0
        %799 = vmatpush1.msra.mxu0 0.0
        %800 = vmatprep.subr.mxu0 0.0
        %801 = vmatpush1.msra.mxu0 0.0
        %802 = vmatprep.subr.mxu0 0.0
        %803 = vmatpush1.msra.mxu0 0.0
        %804 = vmatprep.subr.mxu0 0.0
        %805 = vmatpush1.msra.mxu0 0.0
        %806 = vmatprep.subr.mxu0 0.0
        %807 = vmatpush1.msra.mxu0 0.0
        %808 = vmatprep.subr.mxu0 0.0
        %809 = vmatpush1.msra.mxu0 0.0
        %810 = vmatprep.subr.mxu0 0.0
        %811 = vmatpush1.msra.mxu0 0.0
        %812 = vmatprep.subr.mxu0 0.0
        %813 = vmatpush1.msra.mxu0 0.0
        %814 = vmatprep.subr.mxu0 0.0
        %815 = vmatpush1.msra.mxu0 0.0
        %816 = vmatprep.subr.mxu0 0.0
        %817 = vmatpush1.msra.mxu0 0.0
        %818 = vmatprep.subr.mxu0 0.0
        %819 = vmatpush1.msra.mxu0 0.0
        %820 = vmatprep.mubr.f32.mxu0 0.0
        %821 = vmatmul.mubr.f32.gmra.mrb[0].mxu0 %v754
        %v822 = vpop.f32.mrb[0].mxu0
        %v823 = vadd.f32 %v751, %v822
        %v824 = vpop.f32.mrb[0].mxu0
        %825 = vdwg.mxu0
        %v826 = vld [vmem:[#allocation2] sm:$0xff]
        %vm827 = vcmask 64512
        %v829 = vsel %vm827, %v826, 0
        %v832 = vsel %vm827, %v739, 0
        %834 = vmatprep.subr.mxu0 0.0
        %835 = vmatpush1.xpose.msra.mxu0 %v832
        %836 = vmatprep.subr.mxu0 0.0
        %837 = vmatpush1.xpose.msra.mxu0 0.0
        %838 = vmatprep.subr.mxu0 0.0
        %839 = vmatpush1.xpose.msra.mxu0 0.0
        %840 = vmatprep.subr.mxu0 0.0
        %841 = vmatpush1.xpose.msra.mxu0 0.0
        %842 = vmatprep.subr.mxu0 0.0
        %843 = vmatpush1.xpose.msra.mxu0 0.0
        %844 = vmatprep.subr.mxu0 0.0
        %845 = vmatpush1.xpose.msra.mxu0 0.0
        %846 = vmatprep.subr.mxu0 0.0
        %847 = vmatpush1.xpose.msra.mxu0 0.0
        %848 = vmatprep.subr.mxu0 0.0
        %849 = vmatpush1.xpose.msra.mxu0 0.0
        %850 = vmatprep.subr.mxu0 0.0
        %851 = vmatpush1.xpose.msra.mxu0 0.0
        %852 = vmatprep.subr.mxu0 0.0
        %853 = vmatpush1.xpose.msra.mxu0 0.0
        %854 = vmatprep.subr.mxu0 0.0
        %855 = vmatpush1.xpose.msra.mxu0 0.0
        %856 = vmatprep.subr.mxu0 0.0
        %857 = vmatpush1.xpose.msra.mxu0 0.0
        %858 = vmatprep.subr.mxu0 0.0
        %859 = vmatpush1.xpose.msra.mxu0 0.0
        %860 = vmatprep.subr.mxu0 0.0
        %861 = vmatpush1.xpose.msra.mxu0 0.0
        %862 = vmatprep.subr.mxu0 0.0
        %863 = vmatpush1.xpose.msra.mxu0 0.0
        %864 = vmatprep.subr.mxu0 0.0
        %865 = vmatpush1.xpose.msra.mxu0 0.0
        %866 = vmatprep.subr.mxu0 0.0
        %867 = vmatpush1.xpose.msra.mxu0 0.0
        %868 = vmatprep.subr.mxu0 0.0
        %869 = vmatpush1.xpose.msra.mxu0 0.0
        %870 = vmatprep.subr.mxu0 0.0
        %871 = vmatpush1.xpose.msra.mxu0 0.0
        %872 = vmatprep.subr.mxu0 0.0
        %873 = vmatpush1.xpose.msra.mxu0 0.0
        %874 = vmatprep.subr.mxu0 0.0
        %875 = vmatpush1.xpose.msra.mxu0 0.0
        %876 = vmatprep.subr.mxu0 0.0
        %877 = vmatpush1.xpose.msra.mxu0 0.0
        %878 = vmatprep.subr.mxu0 0.0
        %879 = vmatpush1.xpose.msra.mxu0 0.0
        %880 = vmatprep.subr.mxu0 0.0
        %881 = vmatpush1.xpose.msra.mxu0 0.0
        %882 = vmatprep.subr.mxu0 0.0
        %883 = vmatpush1.xpose.msra.mxu0 0.0
        %884 = vmatprep.subr.mxu0 0.0
        %885 = vmatpush1.xpose.msra.mxu0 0.0
        %886 = vmatprep.subr.mxu0 0.0
        %887 = vmatpush1.xpose.msra.mxu0 0.0
        %888 = vmatprep.subr.mxu0 0.0
        %889 = vmatpush1.xpose.msra.mxu0 0.0
        %890 = vmatprep.subr.mxu0 0.0
        %891 = vmatpush1.xpose.msra.mxu0 0.0
        %892 = vmatprep.subr.mxu0 0.0
        %893 = vmatpush1.xpose.msra.mxu0 0.0
        %894 = vmatprep.subr.mxu0 0.0
        %895 = vmatpush1.xpose.msra.mxu0 0.0
        %896 = vmatprep.subr.mxu0 0.0
        %897 = vmatpush1.xpose.msra.mxu0 0.0
        %898 = vmatprep.mubr.f32.mxu0 0.0
        %899 = vmatmul.mubr.f32.gmra.mrb[0].mxu0 %v829
        %v900 = vpop.f32.mrb[0].mxu0
        %v901 = vadd.f32 0.0, %v900
        %v902 = vpop.f32.mrb[0].mxu0
        %903 = vdwg.mxu0
        %v904 = vld [vmem:[#allocation3] sm:$0xff]
        %v905 = vsel %vm827, %v901, -inf
        %906 = vmax.xlane.f32.xlu0 %v905
        %v907 = vpop.xlane.xlu0 %906
        %v908 = vmax.f32 %v904, %v907
        %v909 = vsub.f32 %v904, %v908
        %v910 = vmul.f32 %v909, 1.442695
        %v911 = vpow.pop %v910
        %913 = vset.pattern.permute.xlu0 0
        %914 = vperm.xlu0 %913, %v908
        %v915 = vpop.permute.xlu0 %914
        %v917 = vsub.f32 %v901, %v915
        %v918 = vmul.f32 %v917, 1.442695
        %v919 = vpow.pop %v918
        %v920 = vld [vmem:[#allocation4] sm:$0xff]
        %v921 = vmul.f32 %v911, %v920
        %v922 = vsel %vm827, %v919, 0.0
        %923 = vadd.xlane.f32.xlu0 %v922
        %v924 = vpop.xlane.xlu0 %923
        %v925 = vadd.f32 %v921, %v924
        %vm926 = vcmask 7168
        %927 = vst.msk [vmem:[#allocation4] sm:$0xff] %vm926, %v925
        %v928 = vld [vmem:[#allocation5] sm:$0xff]
        %930 = vset.pattern.permute.xlu0 0
        %931 = vperm.xlu0 %930, %v911
        %v932 = vpop.permute.xlu0 %931
        %v934 = vmul.f32 %v932, %v928
        %v936 = vsel %vm827, %v919, 0
        %938 = vmatprep.subr.mxu0 0.0
        %939 = vmatpush1.msra.mxu0 %v823
        %940 = vmatprep.subr.mxu0 0.0
        %941 = vmatpush1.msra.mxu0 0.0
        %942 = vmatprep.subr.mxu0 0.0
        %943 = vmatpush1.msra.mxu0 0.0
        %944 = vmatprep.subr.mxu0 0.0
        %945 = vmatpush1.msra.mxu0 0.0
        %946 = vmatprep.subr.mxu0 0.0
        %947 = vmatpush1.msra.mxu0 0.0
        %948 = vmatprep.subr.mxu0 0.0
        %949 = vmatpush1.msra.mxu0 0.0
        %950 = vmatprep.subr.mxu0 0.0
        %951 = vmatpush1.msra.mxu0 0.0
        %952 = vmatprep.subr.mxu0 0.0
        %953 = vmatpush1.msra.mxu0 0.0
        %954 = vmatprep.subr.mxu0 0.0
        %955 = vmatpush1.msra.mxu0 0.0
        %956 = vmatprep.subr.mxu0 0.0
        %957 = vmatpush1.msra.mxu0 0.0
        %958 = vmatprep.subr.mxu0 0.0
        %959 = vmatpush1.msra.mxu0 0.0
        %960 = vmatprep.subr.mxu0 0.0
        %961 = vmatpush1.msra.mxu0 0.0
        %962 = vmatprep.subr.mxu0 0.0
        %963 = vmatpush1.msra.mxu0 0.0
        %964 = vmatprep.subr.mxu0 0.0
        %965 = vmatpush1.msra.mxu0 0.0
        %966 = vmatprep.subr.mxu0 0.0
        %967 = vmatpush1.msra.mxu0 0.0
        %968 = vmatprep.subr.mxu0 0.0
        %969 = vmatpush1.msra.mxu0 0.0
        %970 = vmatprep.subr.mxu0 0.0
        %971 = vmatpush1.msra.mxu0 0.0
        %972 = vmatprep.subr.mxu0 0.0
        %973 = vmatpush1.msra.mxu0 0.0
        %974 = vmatprep.subr.mxu0 0.0
        %975 = vmatpush1.msra.mxu0 0.0
        %976 = vmatprep.subr.mxu0 0.0
        %977 = vmatpush1.msra.mxu0 0.0
        %978 = vmatprep.subr.mxu0 0.0
        %979 = vmatpush1.msra.mxu0 0.0
        %980 = vmatprep.subr.mxu0 0.0
        %981 = vmatpush1.msra.mxu0 0.0
        %982 = vmatprep.subr.mxu0 0.0
        %983 = vmatpush1.msra.mxu0 0.0
        %984 = vmatprep.subr.mxu0 0.0
        %985 = vmatpush1.msra.mxu0 0.0
        %986 = vmatprep.subr.mxu0 0.0
        %987 = vmatpush1.msra.mxu0 0.0
        %988 = vmatprep.subr.mxu0 0.0
        %989 = vmatpush1.msra.mxu0 0.0
        %990 = vmatprep.subr.mxu0 0.0
        %991 = vmatpush1.msra.mxu0 0.0
        %992 = vmatprep.subr.mxu0 0.0
        %993 = vmatpush1.msra.mxu0 0.0
        %994 = vmatprep.subr.mxu0 0.0
        %995 = vmatpush1.msra.mxu0 0.0
        %996 = vmatprep.subr.mxu0 0.0
        %997 = vmatpush1.msra.mxu0 0.0
        %998 = vmatprep.subr.mxu0 0.0
        %999 = vmatpush1.msra.mxu0 0.0
        %1000 = vmatprep.subr.mxu0 0.0
        %1001 = vmatpush1.msra.mxu0 0.0
        %1002 = vmatprep.mubr.f32.mxu0 0.0
        %1003 = vmatmul.mubr.f32.gmra.mrb[0].mxu0 %v936
        %v1004 = vpop.f32.mrb[0].mxu0
        %v1005 = vadd.f32 0.0, %v1004
        %v1006 = vpop.f32.mrb[0].mxu0
        %1007 = vdwg.mxu0
        %v1008 = vadd.f32 %v934, %v1005
        %1009 = vst.msk [vmem:[#allocation5] sm:$0xff] %vm827, %v1008
        %1010 = vst.msk [vmem:[#allocation3] sm:$0xff] %vm926, %v908
        %1011 = vrot.lane.b32.xlu0 %v826, 120
        %v1012 = vpop.permute.xlu0 %1011
        %1013 = vrot.lane.b32.xlu0 %v739, 120
        %v1014 = vpop.permute.xlu0 %1013
        %v1015 = vsel %vm827, %v1012, 0
        %v1017 = vsel %vm827, %v1014, 0
        %1019 = vmatprep.subr.mxu0 0.0
        %1020 = vmatpush1.xpose.msra.mxu0 %v1017
        %1021 = vmatprep.subr.mxu0 0.0
        %1022 = vmatpush1.xpose.msra.mxu0 0.0
        %1023 = vmatprep.subr.mxu0 0.0
        %1024 = vmatpush1.xpose.msra.mxu0 0.0
        %1025 = vmatprep.subr.mxu0 0.0
        %1026 = vmatpush1.xpose.msra.mxu0 0.0
        %1027 = vmatprep.subr.mxu0 0.0
        %1028 = vmatpush1.xpose.msra.mxu0 0.0
        %1029 = vmatprep.subr.mxu0 0.0
        %1030 = vmatpush1.xpose.msra.mxu0 0.0
        %1031 = vmatprep.subr.mxu0 0.0
        %1032 = vmatpush1.xpose.msra.mxu0 0.0
        %1033 = vmatprep.subr.mxu0 0.0
        %1034 = vmatpush1.xpose.msra.mxu0 0.0
        %1035 = vmatprep.subr.mxu0 0.0
        %1036 = vmatpush1.xpose.msra.mxu0 0.0
        %1037 = vmatprep.subr.mxu0 0.0
        %1038 = vmatpush1.xpose.msra.mxu0 0.0
        %1039 = vmatprep.subr.mxu0 0.0
        %1040 = vmatpush1.xpose.msra.mxu0 0.0
        %1041 = vmatprep.subr.mxu0 0.0
        %1042 = vmatpush1.xpose.msra.mxu0 0.0
        %1043 = vmatprep.subr.mxu0 0.0
        %1044 = vmatpush1.xpose.msra.mxu0 0.0
        %1045 = vmatprep.subr.mxu0 0.0
        %1046 = vmatpush1.xpose.msra.mxu0 0.0
        %1047 = vmatprep.subr.mxu0 0.0
        %1048 = vmatpush1.xpose.msra.mxu0 0.0
        %1049 = vmatprep.subr.mxu0 0.0
        %1050 = vmatpush1.xpose.msra.mxu0 0.0
        %1051 = vmatprep.subr.mxu0 0.0
        %1052 = vmatpush1.xpose.msra.mxu0 0.0
        %1053 = vmatprep.subr.mxu0 0.0
        %1054 = vmatpush1.xpose.msra.mxu0 0.0
        %1055 = vmatprep.subr.mxu0 0.0
        %1056 = vmatpush1.xpose.msra.mxu0 0.0
        %1057 = vmatprep.subr.mxu0 0.0
        %1058 = vmatpush1.xpose.msra.mxu0 0.0
        %1059 = vmatprep.subr.mxu0 0.0
        %1060 = vmatpush1.xpose.msra.mxu0 0.0
        %1061 = vmatprep.subr.mxu0 0.0
        %1062 = vmatpush1.xpose.msra.mxu0 0.0
        %1063 = vmatprep.subr.mxu0 0.0
        %1064 = vmatpush1.xpose.msra.mxu0 0.0
        %1065 = vmatprep.subr.mxu0 0.0
        %1066 = vmatpush1.xpose.msra.mxu0 0.0
        %1067 = vmatprep.subr.mxu0 0.0
        %1068 = vmatpush1.xpose.msra.mxu0 0.0
        %1069 = vmatprep.subr.mxu0 0.0
        %1070 = vmatpush1.xpose.msra.mxu0 0.0
        %1071 = vmatprep.subr.mxu0 0.0
        %1072 = vmatpush1.xpose.msra.mxu0 0.0
        %1073 = vmatprep.subr.mxu0 0.0
        %1074 = vmatpush1.xpose.msra.mxu0 0.0
        %1075 = vmatprep.subr.mxu0 0.0
        %1076 = vmatpush1.xpose.msra.mxu0 0.0
        %1077 = vmatprep.subr.mxu0 0.0
        %1078 = vmatpush1.xpose.msra.mxu0 0.0
        %1079 = vmatprep.subr.mxu0 0.0
        %1080 = vmatpush1.xpose.msra.mxu0 0.0
        %1081 = vmatprep.subr.mxu0 0.0
        %1082 = vmatpush1.xpose.msra.mxu0 0.0
        %1083 = vmatprep.mubr.f32.mxu0 0.0
        %1084 = vmatmul.mubr.f32.gmra.mrb[0].mxu0 %v1015
        %v1085 = vpop.f32.mrb[0].mxu0
        %v1086 = vadd.f32 0.0, %v1085
        %v1087 = vpop.f32.mrb[0].mxu0
        %1088 = vdwg.mxu0
        %v1089 = vld [vmem:[#allocation3] sm:$0xff]
        %v1090 = vsel %vm827, %v1086, -inf
        %1091 = vmax.xlane.f32.xlu0 %v1090
        %v1092 = vpop.xlane.xlu0 %1091
        %v1093 = vmax.f32 %v1089, %v1092
        %v1094 = vsub.f32 %v1089, %v1093
        %v1095 = vmul.f32 %v1094, 1.442695
        %v1096 = vpow.pop %v1095
        %1098 = vset.pattern.permute.xlu0 1
        %1099 = vperm.xlu0 %1098, %v1093
        %v1100 = vpop.permute.xlu0 %1099
        %v1102 = vsub.f32 %v1086, %v1100
        %v1103 = vmul.f32 %v1102, 1.442695
        %v1104 = vpow.pop %v1103
        %v1105 = vld [vmem:[#allocation4] sm:$0xff]
        %v1106 = vmul.f32 %v1096, %v1105
        %v1107 = vsel %vm827, %v1104, 0.0
        %1108 = vadd.xlane.f32.xlu0 %v1107
        %v1109 = vpop.xlane.xlu0 %1108
        %v1110 = vadd.f32 %v1106, %v1109
        %vm1111 = vcmask 15368
        %1112 = vst.msk [vmem:[#allocation4] sm:$0xff] %vm1111, %v1110
        %v1113 = vld [vmem:[#allocation5] sm:$0xff]
        %1115 = vset.pattern.permute.xlu0 1
        %1116 = vperm.xlu0 %1115, %v1096
        %v1117 = vpop.permute.xlu0 %1116
        %v1119 = vmul.f32 %v1117, %v1113
        %1121 = vrot.lane.b32.xlu0 %v823, 120
        %v1122 = vpop.permute.xlu0 %1121
        %v1125 = vsel %vm827, %v1104, 0
        %1127 = vmatprep.subr.mxu0 0.0
        %1128 = vmatpush1.msra.mxu0 %v1122
        %1129 = vmatprep.subr.mxu0 0.0
        %1130 = vmatpush1.msra.mxu0 0.0
        %1131 = vmatprep.subr.mxu0 0.0
        %1132 = vmatpush1.msra.mxu0 0.0
        %1133 = vmatprep.subr.mxu0 0.0
        %1134 = vmatpush1.msra.mxu0 0.0
        %1135 = vmatprep.subr.mxu0 0.0
        %1136 = vmatpush1.msra.mxu0 0.0
        %1137 = vmatprep.subr.mxu0 0.0
        %1138 = vmatpush1.msra.mxu0 0.0
        %1139 = vmatprep.subr.mxu0 0.0
        %1140 = vmatpush1.msra.mxu0 0.0
        %1141 = vmatprep.subr.mxu0 0.0
        %1142 = vmatpush1.msra.mxu0 0.0
        %1143 = vmatprep.subr.mxu0 0.0
        %1144 = vmatpush1.msra.mxu0 0.0
        %1145 = vmatprep.subr.mxu0 0.0
        %1146 = vmatpush1.msra.mxu0 0.0
        %1147 = vmatprep.subr.mxu0 0.0
        %1148 = vmatpush1.msra.mxu0 0.0
        %1149 = vmatprep.subr.mxu0 0.0
        %1150 = vmatpush1.msra.mxu0 0.0
        %1151 = vmatprep.subr.mxu0 0.0
        %1152 = vmatpush1.msra.mxu0 0.0
        %1153 = vmatprep.subr.mxu0 0.0
        %1154 = vmatpush1.msra.mxu0 0.0
        %1155 = vmatprep.subr.mxu0 0.0
        %1156 = vmatpush1.msra.mxu0 0.0
        %1157 = vmatprep.subr.mxu0 0.0
        %1158 = vmatpush1.msra.mxu0 0.0
        %1159 = vmatprep.subr.mxu0 0.0
        %1160 = vmatpush1.msra.mxu0 0.0
        %1161 = vmatprep.subr.mxu0 0.0
        %1162 = vmatpush1.msra.mxu0 0.0
        %1163 = vmatprep.subr.mxu0 0.0
        %1164 = vmatpush1.msra.mxu0 0.0
        %1165 = vmatprep.subr.mxu0 0.0
        %1166 = vmatpush1.msra.mxu0 0.0
        %1167 = vmatprep.subr.mxu0 0.0
        %1168 = vmatpush1.msra.mxu0 0.0
        %1169 = vmatprep.subr.mxu0 0.0
        %1170 = vmatpush1.msra.mxu0 0.0
        %1171 = vmatprep.subr.mxu0 0.0
        %1172 = vmatpush1.msra.mxu0 0.0
        %1173 = vmatprep.subr.mxu0 0.0
        %1174 = vmatpush1.msra.mxu0 0.0
        %1175 = vmatprep.subr.mxu0 0.0
        %1176 = vmatpush1.msra.mxu0 0.0
        %1177 = vmatprep.subr.mxu0 0.0
        %1178 = vmatpush1.msra.mxu0 0.0
        %1179 = vmatprep.subr.mxu0 0.0
        %1180 = vmatpush1.msra.mxu0 0.0
        %1181 = vmatprep.subr.mxu0 0.0
        %1182 = vmatpush1.msra.mxu0 0.0
        %1183 = vmatprep.subr.mxu0 0.0
        %1184 = vmatpush1.msra.mxu0 0.0
        %1185 = vmatprep.subr.mxu0 0.0
        %1186 = vmatpush1.msra.mxu0 0.0
        %1187 = vmatprep.subr.mxu0 0.0
        %1188 = vmatpush1.msra.mxu0 0.0
        %1189 = vmatprep.subr.mxu0 0.0
        %1190 = vmatpush1.msra.mxu0 0.0
        %1191 = vmatprep.mubr.f32.mxu0 0.0
        %1192 = vmatmul.mubr.f32.gmra.mrb[0].mxu0 %v1125
        %v1193 = vpop.f32.mrb[0].mxu0
        %v1194 = vadd.f32 0.0, %v1193
        %v1195 = vpop.f32.mrb[0].mxu0
        %1196 = vdwg.mxu0
        %1198 = vrot.lane.b32.xlu0 %v1194, 8
        %v1199 = vpop.permute.xlu0 %1198
        %v1201 = vadd.f32 %v1119, %v1199
        %vm1202 = vcmask 130112
        %1203 = vst.msk [vmem:[#allocation5] sm:$0xff] %vm1202, %v1201
        %1204 = vst.msk [vmem:[#allocation3] sm:$0xff] %vm1111, %v1093
        %1205 = vrot.lane.b32.xlu0 %v826, 112
        %v1206 = vpop.permute.xlu0 %1205
        %1207 = vrot.lane.b32.xlu0 %v739, 112
        %v1208 = vpop.permute.xlu0 %1207
        %v1209 = vsel %vm827, %v1206, 0
        %v1211 = vsel %vm827, %v1208, 0
        %1213 = vmatprep.subr.mxu0 0.0
        %1214 = vmatpush1.xpose.msra.mxu0 %v1211
        %1215 = vmatprep.subr.mxu0 0.0
        %1216 = vmatpush1.xpose.msra.mxu0 0.0
        %1217 = vmatprep.subr.mxu0 0.0
        %1218 = vmatpush1.xpose.msra.mxu0 0.0
        %1219 = vmatprep.subr.mxu0 0.0
        %1220 = vmatpush1.xpose.msra.mxu0 0.0
        %1221 = vmatprep.subr.mxu0 0.0
        %1222 = vmatpush1.xpose.msra.mxu0 0.0
        %1223 = vmatprep.subr.mxu0 0.0
        %1224 = vmatpush1.xpose.msra.mxu0 0.0
        %1225 = vmatprep.subr.mxu0 0.0
        %1226 = vmatpush1.xpose.msra.mxu0 0.0
        %1227 = vmatprep.subr.mxu0 0.0
        %1228 = vmatpush1.xpose.msra.mxu0 0.0
        %1229 = vmatprep.subr.mxu0 0.0
        %1230 = vmatpush1.xpose.msra.mxu0 0.0
        %1231 = vmatprep.subr.mxu0 0.0
        %1232 = vmatpush1.xpose.msra.mxu0 0.0
        %1233 = vmatprep.subr.mxu0 0.0
        %1234 = vmatpush1.xpose.msra.mxu0 0.0
        %1235 = vmatprep.subr.mxu0 0.0
        %1236 = vmatpush1.xpose.msra.mxu0 0.0
        %1237 = vmatprep.subr.mxu0 0.0
        %1238 = vmatpush1.xpose.msra.mxu0 0.0
        %1239 = vmatprep.subr.mxu0 0.0
        %1240 = vmatpush1.xpose.msra.mxu0 0.0
        %1241 = vmatprep.subr.mxu0 0.0
        %1242 = vmatpush1.xpose.msra.mxu0 0.0
        %1243 = vmatprep.subr.mxu0 0.0
        %1244 = vmatpush1.xpose.msra.mxu0 0.0
        %1245 = vmatprep.subr.mxu0 0.0
        %1246 = vmatpush1.xpose.msra.mxu0 0.0
        %1247 = vmatprep.subr.mxu0 0.0
        %1248 = vmatpush1.xpose.msra.mxu0 0.0
        %1249 = vmatprep.subr.mxu0 0.0
        %1250 = vmatpush1.xpose.msra.mxu0 0.0
        %1251 = vmatprep.subr.mxu0 0.0
        %1252 = vmatpush1.xpose.msra.mxu0 0.0
        %1253 = vmatprep.subr.mxu0 0.0
        %1254 = vmatpush1.xpose.msra.mxu0 0.0
        %1255 = vmatprep.subr.mxu0 0.0
        %1256 = vmatpush1.xpose.msra.mxu0 0.0
        %1257 = vmatprep.subr.mxu0 0.0
        %1258 = vmatpush1.xpose.msra.mxu0 0.0
        %1259 = vmatprep.subr.mxu0 0.0
        %1260 = vmatpush1.xpose.msra.mxu0 0.0
        %1261 = vmatprep.subr.mxu0 0.0
        %1262 = vmatpush1.xpose.msra.mxu0 0.0
        %1263 = vmatprep.subr.mxu0 0.0
        %1264 = vmatpush1.xpose.msra.mxu0 0.0
        %1265 = vmatprep.subr.mxu0 0.0
        %1266 = vmatpush1.xpose.msra.mxu0 0.0
        %1267 = vmatprep.subr.mxu0 0.0
        %1268 = vmatpush1.xpose.msra.mxu0 0.0
        %1269 = vmatprep.subr.mxu0 0.0
        %1270 = vmatpush1.xpose.msra.mxu0 0.0
        %1271 = vmatprep.subr.mxu0 0.0
        %1272 = vmatpush1.xpose.msra.mxu0 0.0
        %1273 = vmatprep.subr.mxu0 0.0
        %1274 = vmatpush1.xpose.msra.mxu0 0.0
        %1275 = vmatprep.subr.mxu0 0.0
        %1276 = vmatpush1.xpose.msra.mxu0 0.0
        %1277 = vmatprep.mubr.f32.mxu0 0.0
        %1278 = vmatmul.mubr.f32.gmra.mrb[0].mxu0 %v1209
        %v1279 = vpop.f32.mrb[0].mxu0
        %v1280 = vadd.f32 0.0, %v1279
        %v1281 = vpop.f32.mrb[0].mxu0
        %1282 = vdwg.mxu0
        %v1283 = vld [vmem:[#allocation3] sm:$0xff]
        %v1284 = vsel %vm827, %v1280, -inf
        %1285 = vmax.xlane.f32.xlu0 %v1284
        %v1286 = vpop.xlane.xlu0 %1285
        %v1287 = vmax.f32 %v1283, %v1286
        %v1288 = vsub.f32 %v1283, %v1287
        %v1289 = vmul.f32 %v1288, 1.442695
        %v1290 = vpow.pop %v1289
        %1292 = vset.pattern.permute.xlu0 2
        %1293 = vperm.xlu0 %1292, %v1287
        %v1294 = vpop.permute.xlu0 %1293
        %v1296 = vsub.f32 %v1280, %v1294
        %v1297 = vmul.f32 %v1296, 1.442695
        %v1298 = vpow.pop %v1297
        %v1299 = vld [vmem:[#allocation4] sm:$0xff]
        %v1300 = vmul.f32 %v1290, %v1299
        %v1301 = vsel %vm827, %v1298, 0.0
        %1302 = vadd.xlane.f32.xlu0 %v1301
        %v1303 = vpop.xlane.xlu0 %1302
        %v1304 = vadd.f32 %v1300, %v1303
        %vm1305 = vcmask 23568
        %1306 = vst.msk [vmem:[#allocation4] sm:$0xff] %vm1305, %v1304
        %v1307 = vld [vmem:[#allocation5] sm:$0xff]
        %1309 = vset.pattern.permute.xlu0 2
        %1310 = vperm.xlu0 %1309, %v1290
        %v1311 = vpop.permute.xlu0 %1310
        %v1313 = vmul.f32 %v1311, %v1307
        %1314 = vrot.lane.b32.xlu0 %v823, 112
        %v1315 = vpop.permute.xlu0 %1314
        %v1318 = vsel %vm827, %v1298, 0
        %1320 = vmatprep.subr.mxu0 0.0
        %1321 = vmatpush1.msra.mxu0 %v1315
        %1322 = vmatprep.subr.mxu0 0.0
        %1323 = vmatpush1.msra.mxu0 0.0
        %1324 = vmatprep.subr.mxu0 0.0
        %1325 = vmatpush1.msra.mxu0 0.0
        %1326 = vmatprep.subr.mxu0 0.0
        %1327 = vmatpush1.msra.mxu0 0.0
        %1328 = vmatprep.subr.mxu0 0.0
        %1329 = vmatpush1.msra.mxu0 0.0
        %1330 = vmatprep.subr.mxu0 0.0
        %1331 = vmatpush1.msra.mxu0 0.0
        %1332 = vmatprep.subr.mxu0 0.0
        %1333 = vmatpush1.msra.mxu0 0.0
        %1334 = vmatprep.subr.mxu0 0.0
        %1335 = vmatpush1.msra.mxu0 0.0
        %1336 = vmatprep.subr.mxu0 0.0
        %1337 = vmatpush1.msra.mxu0 0.0
        %1338 = vmatprep.subr.mxu0 0.0
        %1339 = vmatpush1.msra.mxu0 0.0
        %1340 = vmatprep.subr.mxu0 0.0
        %1341 = vmatpush1.msra.mxu0 0.0
        %1342 = vmatprep.subr.mxu0 0.0
        %1343 = vmatpush1.msra.mxu0 0.0
        %1344 = vmatprep.subr.mxu0 0.0
        %1345 = vmatpush1.msra.mxu0 0.0
        %1346 = vmatprep.subr.mxu0 0.0
        %1347 = vmatpush1.msra.mxu0 0.0
        %1348 = vmatprep.subr.mxu0 0.0
        %1349 = vmatpush1.msra.mxu0 0.0
        %1350 = vmatprep.subr.mxu0 0.0
        %1351 = vmatpush1.msra.mxu0 0.0
        %1352 = vmatprep.subr.mxu0 0.0
        %1353 = vmatpush1.msra.mxu0 0.0
        %1354 = vmatprep.subr.mxu0 0.0
        %1355 = vmatpush1.msra.mxu0 0.0
        %1356 = vmatprep.subr.mxu0 0.0
        %1357 = vmatpush1.msra.mxu0 0.0
        %1358 = vmatprep.subr.mxu0 0.0
        %1359 = vmatpush1.msra.mxu0 0.0
        %1360 = vmatprep.subr.mxu0 0.0
        %1361 = vmatpush1.msra.mxu0 0.0
        %1362 = vmatprep.subr.mxu0 0.0
        %1363 = vmatpush1.msra.mxu0 0.0
        %1364 = vmatprep.subr.mxu0 0.0
        %1365 = vmatpush1.msra.mxu0 0.0
        %1366 = vmatprep.subr.mxu0 0.0
        %1367 = vmatpush1.msra.mxu0 0.0
        %1368 = vmatprep.subr.mxu0 0.0
        %1369 = vmatpush1.msra.mxu0 0.0
        %1370 = vmatprep.subr.mxu0 0.0
        %1371 = vmatpush1.msra.mxu0 0.0
        %1372 = vmatprep.subr.mxu0 0.0
        %1373 = vmatpush1.msra.mxu0 0.0
        %1374 = vmatprep.subr.mxu0 0.0
        %1375 = vmatpush1.msra.mxu0 0.0
        %1376 = vmatprep.subr.mxu0 0.0
        %1377 = vmatpush1.msra.mxu0 0.0
        %1378 = vmatprep.subr.mxu0 0.0
        %1379 = vmatpush1.msra.mxu0 0.0
        %1380 = vmatprep.subr.mxu0 0.0
        %1381 = vmatpush1.msra.mxu0 0.0
        %1382 = vmatprep.subr.mxu0 0.0
        %1383 = vmatpush1.msra.mxu0 0.0
        %1384 = vmatprep.mubr.f32.mxu0 0.0
        %1385 = vmatmul.mubr.f32.gmra.mrb[0].mxu0 %v1318
        %v1386 = vpop.f32.mrb[0].mxu0
        %v1387 = vadd.f32 0.0, %v1386
        %v1388 = vpop.f32.mrb[0].mxu0
        %1389 = vdwg.mxu0
        %1391 = vrot.lane.b32.xlu0 %v1387, 16
        %v1392 = vpop.permute.xlu0 %1391
        %v1394 = vadd.f32 %v1313, %v1392
        %vm1395 = vcmask 195712
        %1396 = vst.msk [vmem:[#allocation5] sm:$0xff] %vm1395, %v1394
        %1397 = vst.msk [vmem:[#allocation3] sm:$0xff] %vm1305, %v1287
        %1398 = vrot.lane.b32.xlu0 %v826, 104
        %v1399 = vpop.permute.xlu0 %1398
        %1400 = vrot.lane.b32.xlu0 %v739, 104
        %v1401 = vpop.permute.xlu0 %1400
        %v1402 = vsel %vm827, %v1399, 0
        %v1404 = vsel %vm827, %v1401, 0
        %1406 = vmatprep.subr.mxu0 0.0
        %1407 = vmatpush1.xpose.msra.mxu0 %v1404
        %1408 = vmatprep.subr.mxu0 0.0
        %1409 = vmatpush1.xpose.msra.mxu0 0.0
        %1410 = vmatprep.subr.mxu0 0.0
        %1411 = vmatpush1.xpose.msra.mxu0 0.0
        %1412 = vmatprep.subr.mxu0 0.0
        %1413 = vmatpush1.xpose.msra.mxu0 0.0
        %1414 = vmatprep.subr.mxu0 0.0
        %1415 = vmatpush1.xpose.msra.mxu0 0.0
        %1416 = vmatprep.subr.mxu0 0.0
        %1417 = vmatpush1.xpose.msra.mxu0 0.0
        %1418 = vmatprep.subr.mxu0 0.0
        %1419 = vmatpush1.xpose.msra.mxu0 0.0
        %1420 = vmatprep.subr.mxu0 0.0
        %1421 = vmatpush1.xpose.msra.mxu0 0.0
        %1422 = vmatprep.subr.mxu0 0.0
        %1423 = vmatpush1.xpose.msra.mxu0 0.0
        %1424 = vmatprep.subr.mxu0 0.0
        %1425 = vmatpush1.xpose.msra.mxu0 0.0
        %1426 = vmatprep.subr.mxu0 0.0
        %1427 = vmatpush1.xpose.msra.mxu0 0.0
        %1428 = vmatprep.subr.mxu0 0.0
        %1429 = vmatpush1.xpose.msra.mxu0 0.0
        %1430 = vmatprep.subr.mxu0 0.0
        %1431 = vmatpush1.xpose.msra.mxu0 0.0
        %1432 = vmatprep.subr.mxu0 0.0
        %1433 = vmatpush1.xpose.msra.mxu0 0.0
        %1434 = vmatprep.subr.mxu0 0.0
        %1435 = vmatpush1.xpose.msra.mxu0 0.0
        %1436 = vmatprep.subr.mxu0 0.0
        %1437 = vmatpush1.xpose.msra.mxu0 0.0
        %1438 = vmatprep.subr.mxu0 0.0
        %1439 = vmatpush1.xpose.msra.mxu0 0.0
        %1440 = vmatprep.subr.mxu0 0.0
        %1441 = vmatpush1.xpose.msra.mxu0 0.0
        %1442 = vmatprep.subr.mxu0 0.0
        %1443 = vmatpush1.xpose.msra.mxu0 0.0
        %1444 = vmatprep.subr.mxu0 0.0
        %1445 = vmatpush1.xpose.msra.mxu0 0.0
        %1446 = vmatprep.subr.mxu0 0.0
        %1447 = vmatpush1.xpose.msra.mxu0 0.0
        %1448 = vmatprep.subr.mxu0 0.0
        %1449 = vmatpush1.xpose.msra.mxu0 0.0
        %1450 = vmatprep.subr.mxu0 0.0
        %1451 = vmatpush1.xpose.msra.mxu0 0.0
        %1452 = vmatprep.subr.mxu0 0.0
        %1453 = vmatpush1.xpose.msra.mxu0 0.0
        %1454 = vmatprep.subr.mxu0 0.0
        %1455 = vmatpush1.xpose.msra.mxu0 0.0
        %1456 = vmatprep.subr.mxu0 0.0
        %1457 = vmatpush1.xpose.msra.mxu0 0.0
        %1458 = vmatprep.subr.mxu0 0.0
        %1459 = vmatpush1.xpose.msra.mxu0 0.0
        %1460 = vmatprep.subr.mxu0 0.0
        %1461 = vmatpush1.xpose.msra.mxu0 0.0
        %1462 = vmatprep.subr.mxu0 0.0
        %1463 = vmatpush1.xpose.msra.mxu0 0.0
        %1464 = vmatprep.subr.mxu0 0.0
        %1465 = vmatpush1.xpose.msra.mxu0 0.0
        %1466 = vmatprep.subr.mxu0 0.0
        %1467 = vmatpush1.xpose.msra.mxu0 0.0
        %1468 = vmatprep.subr.mxu0 0.0
        %1469 = vmatpush1.xpose.msra.mxu0 0.0
        %1470 = vmatprep.mubr.f32.mxu0 0.0
        %1471 = vmatmul.mubr.f32.gmra.mrb[0].mxu0 %v1402
        %v1472 = vpop.f32.mrb[0].mxu0
        %v1473 = vadd.f32 0.0, %v1472
        %v1474 = vpop.f32.mrb[0].mxu0
        %1475 = vdwg.mxu0
        %v1476 = vld [vmem:[#allocation3] sm:$0xff]
        %v1477 = vsel %vm827, %v1473, -inf
        %1478 = vmax.xlane.f32.xlu0 %v1477
        %v1479 = vpop.xlane.xlu0 %1478
        %v1480 = vmax.f32 %v1476, %v1479
        %v1481 = vsub.f32 %v1476, %v1480
        %v1482 = vmul.f32 %v1481, 1.442695
        %v1483 = vpow.pop %v1482
        %1485 = vset.pattern.permute.xlu0 3
        %1486 = vperm.xlu0 %1485, %v1480
        %v1487 = vpop.permute.xlu0 %1486
        %v1489 = vsub.f32 %v1473, %v1487
        %v1490 = vmul.f32 %v1489, 1.442695
        %v1491 = vpow.pop %v1490
        %v1492 = vld [vmem:[#allocation4] sm:$0xff]
        %v1493 = vmul.f32 %v1483, %v1492
        %v1494 = vsel %vm827, %v1491, 0.0
        %1495 = vadd.xlane.f32.xlu0 %v1494
        %v1496 = vpop.xlane.xlu0 %1495
        %v1497 = vadd.f32 %v1493, %v1496
        %vm1498 = vcmask 31768
        %1499 = vst.msk [vmem:[#allocation4] sm:$0xff] %vm1498, %v1497
        %v1500 = vld [vmem:[#allocation5] sm:$0xff]
        %1502 = vset.pattern.permute.xlu0 3
        %1503 = vperm.xlu0 %1502, %v1483
        %v1504 = vpop.permute.xlu0 %1503
        %v1506 = vmul.f32 %v1504, %v1500
        %1507 = vrot.lane.b32.xlu0 %v823, 104
        %v1508 = vpop.permute.xlu0 %1507
        %v1511 = vsel %vm827, %v1491, 0
        %1513 = vmatprep.subr.mxu0 0.0
        %1514 = vmatpush1.msra.mxu0 %v1508
        %1515 = vmatprep.subr.mxu0 0.0
        %1516 = vmatpush1.msra.mxu0 0.0
        %1517 = vmatprep.subr.mxu0 0.0
        %1518 = vmatpush1.msra.mxu0 0.0
        %1519 = vmatprep.subr.mxu0 0.0
        %1520 = vmatpush1.msra.mxu0 0.0
        %1521 = vmatprep.subr.mxu0 0.0
        %1522 = vmatpush1.msra.mxu0 0.0
        %1523 = vmatprep.subr.mxu0 0.0
        %1524 = vmatpush1.msra.mxu0 0.0
        %1525 = vmatprep.subr.mxu0 0.0
        %1526 = vmatpush1.msra.mxu0 0.0
        %1527 = vmatprep.subr.mxu0 0.0
        %1528 = vmatpush1.msra.mxu0 0.0
        %1529 = vmatprep.subr.mxu0 0.0
        %1530 = vmatpush1.msra.mxu0 0.0
        %1531 = vmatprep.subr.mxu0 0.0
        %1532 = vmatpush1.msra.mxu0 0.0
        %1533 = vmatprep.subr.mxu0 0.0
        %1534 = vmatpush1.msra.mxu0 0.0
        %1535 = vmatprep.subr.mxu0 0.0
        %1536 = vmatpush1.msra.mxu0 0.0
        %1537 = vmatprep.subr.mxu0 0.0
        %1538 = vmatpush1.msra.mxu0 0.0
        %1539 = vmatprep.subr.mxu0 0.0
        %1540 = vmatpush1.msra.mxu0 0.0
        %1541 = vmatprep.subr.mxu0 0.0
        %1542 = vmatpush1.msra.mxu0 0.0
        %1543 = vmatprep.subr.mxu0 0.0
        %1544 = vmatpush1.msra.mxu0 0.0
        %1545 = vmatprep.subr.mxu0 0.0
        %1546 = vmatpush1.msra.mxu0 0.0
        %1547 = vmatprep.subr.mxu0 0.0
        %1548 = vmatpush1.msra.mxu0 0.0
        %1549 = vmatprep.subr.mxu0 0.0
        %1550 = vmatpush1.msra.mxu0 0.0
        %1551 = vmatprep.subr.mxu0 0.0
        %1552 = vmatpush1.msra.mxu0 0.0
        %1553 = vmatprep.subr.mxu0 0.0
        %1554 = vmatpush1.msra.mxu0 0.0
        %1555 = vmatprep.subr.mxu0 0.0
        %1556 = vmatpush1.msra.mxu0 0.0
        %1557 = vmatprep.subr.mxu0 0.0
        %1558 = vmatpush1.msra.mxu0 0.0
        %1559 = vmatprep.subr.mxu0 0.0
        %1560 = vmatpush1.msra.mxu0 0.0
        %1561 = vmatprep.subr.mxu0 0.0
        %1562 = vmatpush1.msra.mxu0 0.0
        %1563 = vmatprep.subr.mxu0 0.0
        %1564 = vmatpush1.msra.mxu0 0.0
        %1565 = vmatprep.subr.mxu0 0.0
        %1566 = vmatpush1.msra.mxu0 0.0
        %1567 = vmatprep.subr.mxu0 0.0
        %1568 = vmatpush1.msra.mxu0 0.0
        %1569 = vmatprep.subr.mxu0 0.0
        %1570 = vmatpush1.msra.mxu0 0.0
        %1571 = vmatprep.subr.mxu0 0.0
        %1572 = vmatpush1.msra.mxu0 0.0
        %1573 = vmatprep.subr.mxu0 0.0
        %1574 = vmatpush1.msra.mxu0 0.0
        %1575 = vmatprep.subr.mxu0 0.0
        %1576 = vmatpush1.msra.mxu0 0.0
        %1577 = vmatprep.mubr.f32.mxu0 0.0
        %1578 = vmatmul.mubr.f32.gmra.mrb[0].mxu0 %v1511
        %v1579 = vpop.f32.mrb[0].mxu0
        %v1580 = vadd.f32 0.0, %v1579
        %v1581 = vpop.f32.mrb[0].mxu0
        %1582 = vdwg.mxu0
        %1584 = vrot.lane.b32.xlu0 %v1580, 24
        %v1585 = vpop.permute.xlu0 %1584
        %v1587 = vadd.f32 %v1506, %v1585
        %vm1588 = vcmask 261312
        %1589 = vst.msk [vmem:[#allocation5] sm:$0xff] %vm1588, %v1587
        %1590 = vst.msk [vmem:[#allocation3] sm:$0xff] %vm1498, %v1480
        // Predicated region
        $region97: #{tpu_custom_call.1} parent=63 // pred_check
          %p1591 = pneg %p559
        $region98: #{tpu_custom_call.1} parent=63 // pred_check_branch
          %1593 = sbr.rel (%p1591) target = $region100
        $region99: #{tpu_custom_call.1} parent=63 // pred_region
          %v1594 = vld [vmem:[#allocation4] sm:$0xff]
          %vm1595 = vcmp.ne.f32.partialorder %v1594, %v1594
          %v1596 = vrcp.pop %v1594
          %v1597 = vld [vmem:[#allocation5] sm:$0xff]
          %1599 = vset.pattern.permute.xlu0 0
          %1600 = vperm.xlu0 %1599, %v1596
          %v1601 = vpop.permute.xlu0 %1600
          %v1603 = vmul.f32 %v1597, %v1601
          %v1604 = vsel %vm1595, 1, 0
          %1605 = vset.pattern.permute.xlu0 0
          %1606 = vperm.xlu0 %1605, %v1604
          %v1607 = vpop.permute.xlu0 %1606
          %vm1608 = vcmp.eq.s32.totalorder %v1607, 1
          %v1609 = vsel %vm1608, 0.0, %v1603
          %1610 = vst.msk [vmem:[#allocation5] sm:$0xff] %vm827, %v1609
          %v1611 = vld [vmem:[#allocation4] sm:$0xff]
          %vm1612 = vcmp.ne.f32.partialorder %v1611, %v1611
          %v1613 = vrcp.pop %v1611
          %v1614 = vld [vmem:[#allocation5] sm:$0xff]
          %1616 = vset.pattern.permute.xlu0 1
          %1617 = vperm.xlu0 %1616, %v1613
          %v1618 = vpop.permute.xlu0 %1617
          %v1620 = vmul.f32 %v1614, %v1618
          %v1621 = vsel %vm1612, 1, 0
          %1622 = vset.pattern.permute.xlu0 1
          %1623 = vperm.xlu0 %1622, %v1621
          %v1624 = vpop.permute.xlu0 %1623
          %vm1625 = vcmp.eq.s32.totalorder %v1624, 1
          %v1626 = vsel %vm1625, 0.0, %v1620
          %1627 = vst.msk [vmem:[#allocation5] sm:$0xff] %vm1202, %v1626
          %v1628 = vld [vmem:[#allocation4] sm:$0xff]
          %vm1629 = vcmp.ne.f32.partialorder %v1628, %v1628
          %v1630 = vrcp.pop %v1628
          %v1631 = vld [vmem:[#allocation5] sm:$0xff]
          %1633 = vset.pattern.permute.xlu0 2
          %1634 = vperm.xlu0 %1633, %v1630
          %v1635 = vpop.permute.xlu0 %1634
          %v1637 = vmul.f32 %v1631, %v1635
          %v1638 = vsel %vm1629, 1, 0
          %1639 = vset.pattern.permute.xlu0 2
          %1640 = vperm.xlu0 %1639, %v1638
          %v1641 = vpop.permute.xlu0 %1640
          %vm1642 = vcmp.eq.s32.totalorder %v1641, 1
          %v1643 = vsel %vm1642, 0.0, %v1637
          %1644 = vst.msk [vmem:[#allocation5] sm:$0xff] %vm1395, %v1643
          %v1645 = vld [vmem:[#allocation4] sm:$0xff]
          %vm1646 = vcmp.ne.f32.partialorder %v1645, %v1645
          %v1647 = vrcp.pop %v1645
          %v1648 = vld [vmem:[#allocation5] sm:$0xff]
          %1650 = vset.pattern.permute.xlu0 3
          %1651 = vperm.xlu0 %1650, %v1647
          %v1652 = vpop.permute.xlu0 %1651
          %v1654 = vmul.f32 %v1648, %v1652
          %v1655 = vsel %vm1646, 1, 0
          %1656 = vset.pattern.permute.xlu0 3
          %1657 = vperm.xlu0 %1656, %v1655
          %v1658 = vpop.permute.xlu0 %1657
          %vm1659 = vcmp.eq.s32.totalorder %v1658, 1
          %v1660 = vsel %vm1659, 0.0, %v1654
          %1661 = vst.msk [vmem:[#allocation5] sm:$0xff] %vm1588, %v1660
          %v1662 = vld [vmem:[#allocation5] sm:$0xff]
          %v1663 = vld [vmem:[%s9] sm:$0xff]
          %v1664 = vld [vmem:[%s9 + $0x8] sm:$0xff]
          %v1665 = vld [vmem:[%s9 + $0x10] sm:$0xff]
          %v1666 = vld [vmem:[%s9 + $0x18] sm:$0xff]
          %v1667 = vld [vmem:[%s10] sm:$0x1]
          %v1669 = vlaneseq
          %v1670 = vshrl.u32 %v1669, 7
          %v1671 = vsub.s32 0, %v1670
          %v1672 = vrot.slane %v1667, %v1671
          %v1675 = vsel %vm668, %v1662, 0
          %1677 = vmatprep.subr.mxu0 0.0
          %1678 = vmatpush1.msra.mxu0 %v1663
          %1679 = vmatprep.subr.mxu0 0.0
          %1680 = vmatpush1.msra.mxu0 %v1664
          %1681 = vmatprep.subr.mxu0 0.0
          %1682 = vmatpush1.msra.mxu0 %v1665
          %1683 = vmatprep.subr.mxu0 0.0
          %1684 = vmatpush1.msra.mxu0 %v1666
          %1685 = vmatprep.subr.mxu0 0.0
          %1686 = vmatpush1.msra.mxu0 0.0
          %1687 = vmatprep.subr.mxu0 0.0
          %1688 = vmatpush1.msra.mxu0 0.0
          %1689 = vmatprep.subr.mxu0 0.0
          %1690 = vmatpush1.msra.mxu0 0.0
          %1691 = vmatprep.subr.mxu0 0.0
          %1692 = vmatpush1.msra.mxu0 0.0
          %1693 = vmatprep.subr.mxu0 0.0
          %1694 = vmatpush1.msra.mxu0 0.0
          %1695 = vmatprep.subr.mxu0 0.0
          %1696 = vmatpush1.msra.mxu0 0.0
          %1697 = vmatprep.subr.mxu0 0.0
          %1698 = vmatpush1.msra.mxu0 0.0
          %1699 = vmatprep.subr.mxu0 0.0
          %1700 = vmatpush1.msra.mxu0 0.0
          %1701 = vmatprep.subr.mxu0 0.0
          %1702 = vmatpush1.msra.mxu0 0.0
          %1703 = vmatprep.subr.mxu0 0.0
          %1704 = vmatpush1.msra.mxu0 0.0
          %1705 = vmatprep.subr.mxu0 0.0
          %1706 = vmatpush1.msra.mxu0 0.0
          %1707 = vmatprep.subr.mxu0 0.0
          %1708 = vmatpush1.msra.mxu0 0.0
          %1709 = vmatprep.subr.mxu0 0.0
          %1710 = vmatpush1.msra.mxu0 0.0
          %1711 = vmatprep.subr.mxu0 0.0
          %1712 = vmatpush1.msra.mxu0 0.0
          %1713 = vmatprep.subr.mxu0 0.0
          %1714 = vmatpush1.msra.mxu0 0.0
          %1715 = vmatprep.subr.mxu0 0.0
          %1716 = vmatpush1.msra.mxu0 0.0
          %1717 = vmatprep.subr.mxu0 0.0
          %1718 = vmatpush1.msra.mxu0 0.0
          %1719 = vmatprep.subr.mxu0 0.0
          %1720 = vmatpush1.msra.mxu0 0.0
          %1721 = vmatprep.subr.mxu0 0.0
          %1722 = vmatpush1.msra.mxu0 0.0
          %1723 = vmatprep.subr.mxu0 0.0
          %1724 = vmatpush1.msra.mxu0 0.0
          %1725 = vmatprep.subr.mxu0 0.0
          %1726 = vmatpush1.msra.mxu0 0.0
          %1727 = vmatprep.subr.mxu0 0.0
          %1728 = vmatpush1.msra.mxu0 0.0
          %1729 = vmatprep.subr.mxu0 0.0
          %1730 = vmatpush1.msra.mxu0 0.0
          %1731 = vmatprep.subr.mxu0 0.0
          %1732 = vmatpush1.msra.mxu0 0.0
          %1733 = vmatprep.subr.mxu0 0.0
          %1734 = vmatpush1.msra.mxu0 0.0
          %1735 = vmatprep.subr.mxu0 0.0
          %1736 = vmatpush1.msra.mxu0 0.0
          %1737 = vmatprep.subr.mxu0 0.0
          %1738 = vmatpush1.msra.mxu0 0.0
          %1739 = vmatprep.subr.mxu0 0.0
          %1740 = vmatpush1.msra.mxu0 0.0
          %1741 = vmatprep.mubr.f32.mxu0 0.0
          %1742 = vmatmul.mubr.f32.gmra.mrb[0].mxu0 %v1675
          %v1743 = vpop.f32.mrb[0].mxu0
          %v1744 = vadd.f32 %v1672, %v1743
          %v1745 = vpop.f32.mrb[0].mxu0
          %1746 = vdwg.mxu0
          %1747 = vst.msk [vmem:[%s558] sm:$0xff] %vm668, %v1744
        $region100: #{tpu_custom_call.1} parent=63 // pred_fallthru
          _
        %s1748 = sand.u32 %s314, 1
        %s1749 = scalar_lea.sflag [#allocation8], %s1748
        %s1750 = sand.u32 %s314, 1
        %s1751 = smul.addr %s1750, 8
        %s1752 = scalar_lea.vmem [#allocation18], %s1751
        // Predicated region
        $region101: #{tpu_custom_call.1} parent=63 // pred_check
          %p1753 = pneg %p324
        $region102: #{tpu_custom_call.1} parent=63 // pred_check_branch
          %1755 = sbr.rel (%p1753) target = $region104
        $region103: #{tpu_custom_call.1} parent=63 // pred_region
          %s1757 = ssub.s32 128, 128
          %1758 = vsyncadd %s1749, %s1757
          %s1759 = sadd.s32 %s39, %s38
          %s1760 = smul.addr %s1759, 128
          %s1761 = scalar_lea.hbm %s11, %s1760
          %s1763 = sshll.u32 %s1752, 4
          %s1764 = int_to_ptr.vmem [resolvable:$true] %s1763
          %1766 = dma.vmem_to_hbm [thread:$0]  %s1764, 128, %s1761, %s1749
        $region104: #{tpu_custom_call.1} parent=63 // pred_fallthru
          _
      $region64: #{tpu_custom_call.1} parent=5 // pred_fallthru
        _
      %p1767 = scmp.le.s32.totalorder 2, %s28
      // Predicated region
      $region105: #{tpu_custom_call.1} parent=5 // pred_check
        %p1768 = pneg %p1767
      $region106: #{tpu_custom_call.1} parent=5 // pred_check_branch
        %1770 = sbr.rel (%p1768) target = $region108
      $region107: #{tpu_custom_call.1} parent=5 // pred_region
        %s1771 = ssub.s32 %s28, 2
        // Predicated region
        $region109: #{tpu_custom_call.1} parent=107 // pred_check
          %p1772 = pneg %p330
        $region110: #{tpu_custom_call.1} parent=107 // pred_check_branch
          %1774 = sbr.rel (%p1772) target = $region112
        $region111: #{tpu_custom_call.1} parent=107 // pred_region
          %s1775 = sand.u32 %s315, 1
          %s1776 = scalar_lea.sflag [#allocation8], %s1775
          %s1777 = sand.u32 %s315, 1
          %s1778 = smul.addr %s1777, 8
          %s1779 = scalar_lea.vmem [#allocation18], %s1778
          %1780 = dma.done %s1776, 128
        $region112: #{tpu_custom_call.1} parent=107 // pred_fallthru
          _
      $region108: #{tpu_custom_call.1} parent=5 // pred_fallthru
        _
    $region6: #{tpu_custom_call.1} parent=1 // loop_footer
      %s32 = sadd.s32 1, %s28
    $region7: #{tpu_custom_call.1} parent=1 // loop_footer_branch
      %27 = sbr.rel target = $region3
    $region8: #{tpu_custom_call.1} parent=1 // loop_exit
      _
    %1781 = vsyncpa [#allocation7], 1
    %s1782 = scalar_lea.sflag [#allocation7], 1
    %1783 = vsyncpa %s1782, 1
    %1784 = vsyncpa [#allocation10], 1
    %s1785 = scalar_lea.sflag [#allocation10], 1
    %1786 = vsyncpa %s1785, 1
    %1787 = vsyncpa [#allocation13], 1
    %1788 = vsyncpa [#allocation16], 1
    %1789 = vsyncpa [#allocation8], 1
    %s1790 = scalar_lea.sflag [#allocation8], 1
    %1791 = vsyncpa %s1790, 1

</llo_original>
